<compile_context>
chip_gen: v7x
topology: tpu7x:2x2x1
jax: 0.10.0
libtpu: 0.0.40
codegen_flags: <defaults>
</compile_context>

<pallas_src>
import functools

import jax
import jax.numpy as jnp
from jax.experimental import pallas as pl
from jax.experimental.pallas import tpu as pltpu


# ---------------------------------------------------------------------------
# Fused ARBlock kernel: one batch element per grid step, lane-dense (C, HW)
# ---------------------------------------------------------------------------
def _arblock_kernel(x_ref, taps_ref, w1_ref, b1_ref, w2_ref, b2_ref,
                    wi_ref, bi_ref, wf_ref, bf_ref,
                    clear_ref, csc_ref, *, H, W, K):
    f32 = jnp.float32
    bf16 = jnp.bfloat16
    P = K - 1
    T = 2 * K - 1
    HW = H * W

    xs = x_ref[...].astype(f32) * 255.0                       # (C, HW)
    C = xs.shape[0]
    tv = taps_ref[...]                                         # (C, T) normalized taps

    lane = jax.lax.broadcasted_iota(jnp.int32, (1, HW), 1)     # flat spatial index
    wcol = lane % W                                            # within-row column

    def lane_shift(a, d):
        # a[:, i] <- a[:, i + d]  (circular along lanes; callers mask the wrap)
        return a if d == 0 else pltpu.roll(a, (-d) % HW, axis=1)

    def shift2d(a, dy, dx):
        # a[:, h*W+w] <- a[:, (h+dy)*W + (w+dx)], zero outside the image
        sh = lane_shift(a, dy * W + dx)
        if dy < 0:
            sh = jnp.where(lane >= (-dy) * W, sh, 0.0)
        elif dy > 0:
            sh = jnp.where(lane < HW - dy * W, sh, 0.0)
        if dx < 0:
            sh = jnp.where(wcol >= -dx, sh, 0.0)
        elif dx > 0:
            sh = jnp.where(wcol < W - dx, sh, 0.0)
        return sh

    # ------------------- ASFConv (separable depthwise, reflection padded) -------------
    # H direction: reflection-pad by concatenating row blocks, then T full-row shifts
    # (static lane slices of the padded slab -- no masks needed).
    top = [xs[:, p * W:(p + 1) * W] for p in range(P, 0, -1)]            # rows P .. 1
    bot = [xs[:, (H - 1 - j) * W:(H - j) * W] for j in range(1, P + 1)]  # rows H-2 .. H-1-P
    xp = jnp.concatenate(top + [xs] + bot, axis=1)                       # (C, (H+2P)*W)
    tmp = jnp.zeros((C, HW), f32)
    for t in range(T):
        tmp = tmp + tv[:, t:t + 1] * xp[:, t * W:t * W + HW]

    # W direction: lane rolls + column masks; reflection at the left/right image edges
    # is P*(P+1) single-column corrections (all source offsets lie in [-P, P]).
    rolled = {d: lane_shift(tmp, d) for d in range(-P, P + 1)}
    out = jnp.zeros((C, HW), f32)
    for s in range(-P, P + 1):
        sh = rolled[s]
        if s < 0:
            sh = jnp.where(wcol >= -s, sh, 0.0)
        elif s > 0:
            sh = jnp.where(wcol < W - s, sh, 0.0)
        out = out + tv[:, s + P:s + P + 1] * sh
    for s in range(-P, 0):                    # left edge: w + s < 0 -> source col -(w+s)
        for w0 in range(0, -s):
            out = out + tv[:, s + P:s + P + 1] * jnp.where(
                wcol == w0, rolled[-2 * w0 - s], 0.0)
    for s in range(1, P + 1):                 # right edge: w + s >= W -> 2(W-1)-(w+s)
        for w0 in range(W - s, W):
            out = out + tv[:, s + P:s + P + 1] * jnp.where(
                wcol == w0, rolled[2 * (W - 1) - 2 * w0 - s], 0.0)

    csc = jnp.log(out + 1.0)                                   # (C, HW), stays f32
    refl = jnp.log(xs + 1.0) - csc
    csc_ref[...] = csc.astype(csc_ref.dtype)

    # ------------------- RPath: dilated (d=2) 3x3 convs as single im2col matmuls ------
    def im2col_d2(a):
        # (Cin, HW) f32 -> (9*Cin, HW) bf16, tap-major rows (matches wrapper weights)
        return jnp.concatenate(
            [shift2d(a, dy, dx) for dy in (-2, 0, 2) for dx in (-2, 0, 2)],
            axis=0).astype(bf16)

    h = jnp.dot(w1_ref[...], im2col_d2(refl),
                preferred_element_type=f32) + b1_ref[...]
    h = jnp.maximum(h, 0.0)
    h = jnp.dot(w2_ref[...], im2col_d2(h),
                preferred_element_type=f32) + b2_ref[...]
    h = jnp.maximum(h, 0.0)
    refl2 = h + refl                                           # residual add (f32)

    # ------------------- IPath (1x1) + fusion (1x1): one MXU matmul each --------------
    illu = jnp.maximum(
        jnp.dot(wi_ref[...], csc.astype(bf16),
                preferred_element_type=f32) + bi_ref[...], 0.0)
    fuse_in = jnp.concatenate([refl2, illu], axis=0).astype(bf16)   # (2C, HW)
    clear = jnp.dot(wf_ref[...], fuse_in,
                    preferred_element_type=f32) + bf_ref[...]
    clear_ref[...] = jnp.maximum(clear, 0.0).astype(clear_ref.dtype)


# ---------------------------------------------------------------------------
# Wrapper: full ARBlock forward
# ---------------------------------------------------------------------------
@functools.partial(jax.jit, static_argnames=("Ksize",))
def arblock_forward(x, params, *, Ksize):
    B, C, H, W = x.shape
    OC = params["rpath_w1"].shape[0]
    K = Ksize
    HW = H * W
    f32, bf16 = jnp.float32, jnp.bfloat16
    assert OC == C, "ARBlock's residual add / fusion width require OChannel == inChannel"
    assert H > K - 1 and W > K - 1, "reflection pad requires H, W > Ksize - 1"

    # --- ASFConv tap construction (tiny parameter math, plain JAX) ---
    yk = jnp.abs(params["yKernel"].reshape(C, K).astype(f32))
    yk = jnp.cumsum(yk, axis=1)
    taps = jnp.concatenate([yk, yk[:, ::-1][:, 1:]], axis=1)              # (C, 2K-1)
    taps = taps / (jnp.sum(taps, axis=1, keepdims=True) + 1e-8)

    # --- im2col weight layout (tap-major, then cin); bf16 operands for the MXU ---
    w1 = params["rpath_w1"].astype(f32).transpose(0, 2, 3, 1).reshape(OC, 9 * C).astype(bf16)
    b1 = params["rpath_b1"].astype(f32).reshape(OC, 1)
    w2 = params["rpath_w2"].astype(f32).transpose(0, 2, 3, 1).reshape(OC, 9 * OC).astype(bf16)
    b2 = params["rpath_b2"].astype(f32).reshape(OC, 1)
    wi = params["ipath_w"].astype(f32).reshape(OC, C).astype(bf16)
    bi = params["ipath_b"].astype(f32).reshape(OC, 1)
    wf = params["fusion_w"].astype(f32).reshape(OC, 2 * C).astype(bf16)
    bf = params["fusion_b"].astype(f32).reshape(OC, 1)

    x_f = x.reshape(B, C, HW)          # lane-dense layout (free reshape outside kernel)

    try:
        vmem_cap = pltpu.get_tpu_info().vmem_capacity_bytes
    except Exception:                  # conservative fallback if the query fails
        vmem_cap = 64 * 1024 * 1024
    vmem_limit = min(int(vmem_cap * 0.75), 96 * 1024 * 1024)

    clear, csc = pl.pallas_call(
        functools.partial(_arblock_kernel, H=H, W=W, K=K),
        grid=(B,),
        in_specs=[
            pl.BlockSpec((None, C, HW), lambda b: (b, 0, 0)),   # x
            pl.BlockSpec((C, 2 * K - 1), lambda b: (0, 0)),     # taps (VMEM vector)
            pl.BlockSpec((OC, 9 * C), lambda b: (0, 0)),        # rpath w1 (im2col)
            pl.BlockSpec((OC, 1), lambda b: (0, 0)),            # rpath b1
            pl.BlockSpec((OC, 9 * OC), lambda b: (0, 0)),       # rpath w2 (im2col)
            pl.BlockSpec((OC, 1), lambda b: (0, 0)),            # rpath b2
            pl.BlockSpec((OC, C), lambda b: (0, 0)),            # ipath w
            pl.BlockSpec((OC, 1), lambda b: (0, 0)),            # ipath b
            pl.BlockSpec((OC, 2 * C), lambda b: (0, 0)),        # fusion w
            pl.BlockSpec((OC, 1), lambda b: (0, 0)),            # fusion b
        ],
        out_specs=[
            pl.BlockSpec((None, OC, HW), lambda b: (b, 0, 0)),  # clear (lane-dense)
            pl.BlockSpec((None, C, HW), lambda b: (b, 0, 0)),   # csc   (lane-dense)
        ],
        out_shape=[
            jax.ShapeDtypeStruct((B, OC, HW), f32),
            jax.ShapeDtypeStruct((B, C, HW), f32),
        ],
        compiler_params=pltpu.CompilerParams(
            dimension_semantics=("parallel",),
            vmem_limit_bytes=vmem_limit),
    )(x_f, taps, w1, b1, w2, b2, wi, bi, wf, bf)

    clear = clear.reshape(B, OC, H, W).astype(x.dtype)
    csc = csc.reshape(B, C, H, W).astype(x.dtype)
    return clear, csc


# ---------------------------------------------------------------------------
# Pure-JAX reference matching the PyTorch forward (for validation only)
# ---------------------------------------------------------------------------
def _conv2d_ref(x, w, b, *, padding, dilation=(1, 1), groups=1):
    y = jax.lax.conv_general_dilated(
        x, w, window_strides=(1, 1), padding=padding, rhs_dilation=dilation,
        dimension_numbers=("NCHW", "OIHW", "NCHW"), feature_group_count=groups,
        precision=jax.lax.Precision.HIGHEST)
    if b is not None:
        y = y + b.reshape(1, -1, 1, 1)
    return y


def arblock_reference(x, params, *, Ksize):
    K = Ksize
    P = K - 1
    C = x.shape[1]
    xs = x * 255.0
    logx = jnp.log(xs + 1.0)

    yk = jnp.abs(params["yKernel"].astype(jnp.float32))          # (C,1,K,1)
    yk = jnp.cumsum(yk, axis=2)
    yk = jnp.concatenate([yk, jnp.flip(yk, axis=2)[:, :, 1:, :]], axis=2)
    yk = yk / (jnp.sum(yk, axis=2, keepdims=True) + 1e-8)        # (C,1,2K-1,1)
    xk = jnp.transpose(yk, (0, 1, 3, 2))                         # (C,1,1,2K-1)

    xpad = jnp.pad(xs, ((0, 0), (0, 0), (P, P), (P, P)), mode="reflect")
    t = _conv2d_ref(xpad, yk, None, padding="VALID", groups=C)
    csc_raw = _conv2d_ref(t, xk, None, padding="VALID", groups=C)
    CSC = jnp.log(csc_raw + 1.0)
    refl = logx - CSC

    illu = jax.nn.relu(_conv2d_ref(CSC, params["ipath_w"], params["ipath_b"],
                                   padding="VALID"))
    h = jax.nn.relu(_conv2d_ref(refl, params["rpath_w1"], params["rpath_b1"],
                                padding=((2, 2), (2, 2)), dilation=(2, 2)))
    h = jax.nn.relu(_conv2d_ref(h, params["rpath_w2"], params["rpath_b2"],
                                padding=((2, 2), (2, 2)), dilation=(2, 2)))
    refl2 = h + refl
    clear = jax.nn.relu(_conv2d_ref(jnp.concatenate([refl2, illu], axis=1),
                                    params["fusion_w"], params["fusion_b"],
                                    padding="VALID"))
    return clear, CSC


if __name__ == "__main__":
    B, C, OC, H, W, K = 2, 8, 8, 16, 16, 3

    key = jax.random.PRNGKey(0)
    ks = jax.random.split(key, 10)
    x = jax.random.uniform(ks[0], (B, C, H, W), jnp.float32)     # image-like in [0, 1)
    params = {
        "yKernel":  jax.random.uniform(ks[1], (C, 1, K, 1), jnp.float32, 0.5, 1.5),
        "rpath_w1": jax.random.normal(ks[2], (OC, C, 3, 3), jnp.float32) * 0.1,
        "rpath_b1": jax.random.normal(ks[3], (OC,), jnp.float32) * 0.1,
        "rpath_w2": jax.random.normal(ks[4], (OC, OC, 3, 3), jnp.float32) * 0.1,
        "rpath_b2": jax.random.normal(ks[5], (OC,), jnp.float32) * 0.1,
        "ipath_w":  jax.random.normal(ks[6], (OC, C, 1, 1), jnp.float32) * 0.1,
        "ipath_b":  jax.random.normal(ks[7], (OC,), jnp.float32) * 0.1,
        "fusion_w": jax.random.normal(ks[8], (OC, 2 * C, 1, 1), jnp.float32) * 0.1,
        "fusion_b": jax.random.normal(ks[9], (OC,), jnp.float32) * 0.1,
    }

    clear, csc = arblock_forward(x, params, Ksize=K)
    clear, csc = jax.block_until_ready((clear, csc))

    clear_ref, csc_ref = arblock_reference(x, params, Ksize=K)
    assert clear.shape == (B, OC, H, W) and csc.shape == (B, C, H, W)
    assert bool(jnp.all(jnp.isfinite(clear))) and bool(jnp.all(jnp.isfinite(csc)))
    # CSC path is full f32 -> tight tolerance; clear uses bf16 MXU operands (f32 acc).
    assert jnp.allclose(csc, csc_ref, atol=1e-3, rtol=1e-3), "CSC mismatch vs reference"
    assert jnp.allclose(clear, clear_ref, atol=3e-2, rtol=3e-2), "clear mismatch vs reference"

    print("KERNEL_OK")
</pallas_src>

<mosaic_0001>
module attributes {stable_mosaic.version = 11 : i64} {
  func.func @_arblock_kernel(%arg0: i32, %arg1: memref<1x8x256xf32, #tpu.memory_space<vmem>>, %arg2: memref<8x5xf32, #tpu.memory_space<vmem>>, %arg3: memref<8x72xbf16, #tpu.memory_space<vmem>>, %arg4: memref<8x1xf32, #tpu.memory_space<vmem>>, %arg5: memref<8x72xbf16, #tpu.memory_space<vmem>>, %arg6: memref<8x1xf32, #tpu.memory_space<vmem>>, %arg7: memref<8x8xbf16, #tpu.memory_space<vmem>>, %arg8: memref<8x1xf32, #tpu.memory_space<vmem>>, %arg9: memref<8x16xbf16, #tpu.memory_space<vmem>>, %arg10: memref<8x1xf32, #tpu.memory_space<vmem>>, %arg11: memref<1x8x256xf32, #tpu.memory_space<vmem>>, %arg12: memref<1x8x256xf32, #tpu.memory_space<vmem>>) attributes {dimension_semantics = [#tpu.dimension_semantics<parallel>], iteration_bounds = array<i64: 2>, scalar_prefetch = 0 : i64, scratch_operands = 0 : i64, tpu.core_type = #tpu.core_type<tc>, window_params = [{transform_indices = @transform_0, window_bounds = array<i64: 1, 8, 256>}, {pipeline_mode = #tpu.pipeline_mode<synchronous>, transform_indices = @transform_1, window_bounds = array<i64: 8, 5>}, {pipeline_mode = #tpu.pipeline_mode<synchronous>, transform_indices = @transform_2, window_bounds = array<i64: 8, 72>}, {pipeline_mode = #tpu.pipeline_mode<synchronous>, transform_indices = @transform_3, window_bounds = array<i64: 8, 1>}, {pipeline_mode = #tpu.pipeline_mode<synchronous>, transform_indices = @transform_4, window_bounds = array<i64: 8, 72>}, {pipeline_mode = #tpu.pipeline_mode<synchronous>, transform_indices = @transform_5, window_bounds = array<i64: 8, 1>}, {pipeline_mode = #tpu.pipeline_mode<synchronous>, transform_indices = @transform_6, window_bounds = array<i64: 8, 8>}, {pipeline_mode = #tpu.pipeline_mode<synchronous>, transform_indices = @transform_7, window_bounds = array<i64: 8, 1>}, {pipeline_mode = #tpu.pipeline_mode<synchronous>, transform_indices = @transform_8, window_bounds = array<i64: 8, 16>}, {pipeline_mode = #tpu.pipeline_mode<synchronous>, transform_indices = @transform_9, window_bounds = array<i64: 8, 1>}, {transform_indices = @transform_10, window_bounds = array<i64: 1, 8, 256>}, {transform_indices = @transform_11, window_bounds = array<i64: 1, 8, 256>}]} {
    %c0 = arith.constant 0 : index
    %c0_0 = arith.constant 0 : index
    %c0_1 = arith.constant 0 : index
    %0 = vector.load %arg1[%c0, %c0_0, %c0_1] : memref<1x8x256xf32, #tpu.memory_space<vmem>>, vector<1x8x256xf32>
    %1 = vector.shape_cast %0 : vector<1x8x256xf32> to vector<8x256xf32>
    %cst = arith.constant 2.550000e+02 : f32
    %2 = vector.broadcast %cst : f32 to vector<8x256xf32>
    %3 = arith.mulf %1, %2 : vector<8x256xf32>
    %c0_2 = arith.constant 0 : index
    %c0_3 = arith.constant 0 : index
    %4 = vector.load %arg2[%c0_2, %c0_3] : memref<8x5xf32, #tpu.memory_space<vmem>>, vector<8x5xf32>
    %5 = tpu.iota {dimensions = array<i32: 1>} : vector<1x256xi32>
    %c16_i32 = arith.constant 16 : i32
    %c0_i32 = arith.constant 0 : i32
    %6 = arith.cmpi eq, %c16_i32, %c0_i32 : i32
    %c1_i32 = arith.constant 1 : i32
    %7 = arith.select %6, %c1_i32, %c16_i32 : i32
    %8 = vector.broadcast %7 : i32 to vector<1x256xi32>
    %9 = arith.remsi %5, %8 : vector<1x256xi32>
    %c0_i32_4 = arith.constant 0 : i32
    %10 = vector.broadcast %c0_i32_4 : i32 to vector<1x256xi32>
    %11 = arith.cmpi ne, %9, %10 : vector<1x256xi32>
    %c0_i32_5 = arith.constant 0 : i32
    %12 = vector.broadcast %c0_i32_5 : i32 to vector<1x256xi32>
    %13 = arith.cmpi slt, %9, %12 : vector<1x256xi32>
    %c0_i32_6 = arith.constant 0 : i32
    %14 = arith.cmpi slt, %7, %c0_i32_6 : i32
    %15 = vector.broadcast %14 : i1 to vector<1x256xi1>
    %16 = vector.broadcast %15 : vector<1x256xi1> to vector<1x256xi1>
    %17 = arith.xori %13, %16 : vector<1x256xi1>
    %18 = arith.andi %17, %11 : vector<1x256xi1>
    %19 = vector.broadcast %7 : i32 to vector<1x256xi32>
    %20 = arith.addi %9, %19 : vector<1x256xi32>
    %21 = arith.select %18, %20, %9 : vector<1x256xi1>, vector<1x256xi32>
    %22 = vector.extract_strided_slice %3 {offsets = [0, 32], sizes = [8, 16], strides = [1, 1]} : vector<8x256xf32> to vector<8x16xf32>
    %23 = vector.extract_strided_slice %3 {offsets = [0, 16], sizes = [8, 16], strides = [1, 1]} : vector<8x256xf32> to vector<8x16xf32>
    %24 = vector.extract_strided_slice %3 {offsets = [0, 224], sizes = [8, 16], strides = [1, 1]} : vector<8x256xf32> to vector<8x16xf32>
    %25 = vector.extract_strided_slice %3 {offsets = [0, 208], sizes = [8, 16], strides = [1, 1]} : vector<8x256xf32> to vector<8x16xf32>
    %26 = tpu.concatenate %22, %23, %3, %24, %25 in 1 : vector<8x16xf32>, vector<8x16xf32>, vector<8x256xf32>, vector<8x16xf32>, vector<8x16xf32> -> vector<8x320xf32>
    %cst_7 = arith.constant 0.000000e+00 : f32
    %27 = vector.broadcast %cst_7 : f32 to vector<8x256xf32>
    %28 = vector.extract_strided_slice %4 {offsets = [0, 0], sizes = [8, 1], strides = [1, 1]} : vector<8x5xf32> to vector<8x1xf32>
    %29 = vector.extract_strided_slice %26 {offsets = [0, 0], sizes = [8, 256], strides = [1, 1]} : vector<8x320xf32> to vector<8x256xf32>
    %30 = vector.broadcast %28 : vector<8x1xf32> to vector<8x256xf32>
    %31 = arith.mulf %30, %29 : vector<8x256xf32>
    %32 = arith.addf %27, %31 : vector<8x256xf32>
    %33 = vector.extract_strided_slice %4 {offsets = [0, 1], sizes = [8, 1], strides = [1, 1]} : vector<8x5xf32> to vector<8x1xf32>
    %34 = vector.extract_strided_slice %26 {offsets = [0, 16], sizes = [8, 256], strides = [1, 1]} : vector<8x320xf32> to vector<8x256xf32>
    %35 = vector.broadcast %33 : vector<8x1xf32> to vector<8x256xf32>
    %36 = arith.mulf %35, %34 : vector<8x256xf32>
    %37 = arith.addf %32, %36 : vector<8x256xf32>
    %38 = vector.extract_strided_slice %4 {offsets = [0, 2], sizes = [8, 1], strides = [1, 1]} : vector<8x5xf32> to vector<8x1xf32>
    %39 = vector.extract_strided_slice %26 {offsets = [0, 32], sizes = [8, 256], strides = [1, 1]} : vector<8x320xf32> to vector<8x256xf32>
    %40 = vector.broadcast %38 : vector<8x1xf32> to vector<8x256xf32>
    %41 = arith.mulf %40, %39 : vector<8x256xf32>
    %42 = arith.addf %37, %41 : vector<8x256xf32>
    %43 = vector.extract_strided_slice %4 {offsets = [0, 3], sizes = [8, 1], strides = [1, 1]} : vector<8x5xf32> to vector<8x1xf32>
    %44 = vector.extract_strided_slice %26 {offsets = [0, 48], sizes = [8, 256], strides = [1, 1]} : vector<8x320xf32> to vector<8x256xf32>
    %45 = vector.broadcast %43 : vector<8x1xf32> to vector<8x256xf32>
    %46 = arith.mulf %45, %44 : vector<8x256xf32>
    %47 = arith.addf %42, %46 : vector<8x256xf32>
    %48 = vector.extract_strided_slice %4 {offsets = [0, 4], sizes = [8, 1], strides = [1, 1]} : vector<8x5xf32> to vector<8x1xf32>
    %49 = vector.extract_strided_slice %26 {offsets = [0, 64], sizes = [8, 256], strides = [1, 1]} : vector<8x320xf32> to vector<8x256xf32>
    %50 = vector.broadcast %48 : vector<8x1xf32> to vector<8x256xf32>
    %51 = arith.mulf %50, %49 : vector<8x256xf32>
    %52 = arith.addf %47, %51 : vector<8x256xf32>
    %c2_i32 = arith.constant 2 : i32
    %53 = tpu.dynamic_rotate %52 by %c2_i32 dim 1 : vector<8x256xf32>, i32 -> vector<8x256xf32>
    %c1_i32_8 = arith.constant 1 : i32
    %54 = tpu.dynamic_rotate %52 by %c1_i32_8 dim 1 : vector<8x256xf32>, i32 -> vector<8x256xf32>
    %c255_i32 = arith.constant 255 : i32
    %55 = tpu.dynamic_rotate %52 by %c255_i32 dim 1 : vector<8x256xf32>, i32 -> vector<8x256xf32>
    %c254_i32 = arith.constant 254 : i32
    %56 = tpu.dynamic_rotate %52 by %c254_i32 dim 1 : vector<8x256xf32>, i32 -> vector<8x256xf32>
    %cst_9 = arith.constant 0.000000e+00 : f32
    %57 = vector.broadcast %cst_9 : f32 to vector<8x256xf32>
    %c2_i32_10 = arith.constant 2 : i32
    %58 = vector.broadcast %c2_i32_10 : i32 to vector<1x256xi32>
    %59 = arith.cmpi sge, %21, %58 : vector<1x256xi32>
    %cst_11 = arith.constant 0.000000e+00 : f32
    %60 = vector.shape_cast %59 : vector<1x256xi1> to vector<1x256xi1>
    %61 = vector.broadcast %60 : vector<1x256xi1> to vector<8x256xi1>
    %62 = vector.broadcast %cst_11 : f32 to vector<8x256xf32>
    %63 = arith.select %61, %53, %62 : vector<8x256xi1>, vector<8x256xf32>
    %64 = vector.extract_strided_slice %4 {offsets = [0, 0], sizes = [8, 1], strides = [1, 1]} : vector<8x5xf32> to vector<8x1xf32>
    %65 = vector.broadcast %64 : vector<8x1xf32> to vector<8x256xf32>
    %66 = arith.mulf %65, %63 : vector<8x256xf32>
    %67 = arith.addf %57, %66 : vector<8x256xf32>
    %c1_i32_12 = arith.constant 1 : i32
    %68 = vector.broadcast %c1_i32_12 : i32 to vector<1x256xi32>
    %69 = arith.cmpi sge, %21, %68 : vector<1x256xi32>
    %cst_13 = arith.constant 0.000000e+00 : f32
    %70 = vector.shape_cast %69 : vector<1x256xi1> to vector<1x256xi1>
    %71 = vector.broadcast %70 : vector<1x256xi1> to vector<8x256xi1>
    %72 = vector.broadcast %cst_13 : f32 to vector<8x256xf32>
    %73 = arith.select %71, %54, %72 : vector<8x256xi1>, vector<8x256xf32>
    %74 = vector.extract_strided_slice %4 {offsets = [0, 1], sizes = [8, 1], strides = [1, 1]} : vector<8x5xf32> to vector<8x1xf32>
    %75 = vector.broadcast %74 : vector<8x1xf32> to vector<8x256xf32>
    %76 = arith.mulf %75, %73 : vector<8x256xf32>
    %77 = arith.addf %67, %76 : vector<8x256xf32>
    %78 = vector.extract_strided_slice %4 {offsets = [0, 2], sizes = [8, 1], strides = [1, 1]} : vector<8x5xf32> to vector<8x1xf32>
    %79 = vector.broadcast %78 : vector<8x1xf32> to vector<8x256xf32>
    %80 = arith.mulf %79, %52 : vector<8x256xf32>
    %81 = arith.addf %77, %80 : vector<8x256xf32>
    %c15_i32 = arith.constant 15 : i32
    %82 = vector.broadcast %c15_i32 : i32 to vector<1x256xi32>
    %83 = arith.cmpi slt, %21, %82 : vector<1x256xi32>
    %cst_14 = arith.constant 0.000000e+00 : f32
    %84 = vector.shape_cast %83 : vector<1x256xi1> to vector<1x256xi1>
    %85 = vector.broadcast %84 : vector<1x256xi1> to vector<8x256xi1>
    %86 = vector.broadcast %cst_14 : f32 to vector<8x256xf32>
    %87 = arith.select %85, %55, %86 : vector<8x256xi1>, vector<8x256xf32>
    %88 = vector.extract_strided_slice %4 {offsets = [0, 3], sizes = [8, 1], strides = [1, 1]} : vector<8x5xf32> to vector<8x1xf32>
    %89 = vector.broadcast %88 : vector<8x1xf32> to vector<8x256xf32>
    %90 = arith.mulf %89, %87 : vector<8x256xf32>
    %91 = arith.addf %81, %90 : vector<8x256xf32>
    %c14_i32 = arith.constant 14 : i32
    %92 = vector.broadcast %c14_i32 : i32 to vector<1x256xi32>
    %93 = arith.cmpi slt, %21, %92 : vector<1x256xi32>
    %cst_15 = arith.constant 0.000000e+00 : f32
    %94 = vector.shape_cast %93 : vector<1x256xi1> to vector<1x256xi1>
    %95 = vector.broadcast %94 : vector<1x256xi1> to vector<8x256xi1>
    %96 = vector.broadcast %cst_15 : f32 to vector<8x256xf32>
    %97 = arith.select %95, %56, %96 : vector<8x256xi1>, vector<8x256xf32>
    %98 = vector.extract_strided_slice %4 {offsets = [0, 4], sizes = [8, 1], strides = [1, 1]} : vector<8x5xf32> to vector<8x1xf32>
    %99 = vector.broadcast %98 : vector<8x1xf32> to vector<8x256xf32>
    %100 = arith.mulf %99, %97 : vector<8x256xf32>
    %101 = arith.addf %91, %100 : vector<8x256xf32>
    %102 = vector.extract_strided_slice %4 {offsets = [0, 0], sizes = [8, 1], strides = [1, 1]} : vector<8x5xf32> to vector<8x1xf32>
    %c0_i32_16 = arith.constant 0 : i32
    %103 = vector.broadcast %c0_i32_16 : i32 to vector<1x256xi32>
    %104 = arith.cmpi eq, %21, %103 : vector<1x256xi32>
    %cst_17 = arith.constant 0.000000e+00 : f32
    %105 = vector.shape_cast %104 : vector<1x256xi1> to vector<1x256xi1>
    %106 = vector.broadcast %105 : vector<1x256xi1> to vector<8x256xi1>
    %107 = vector.broadcast %cst_17 : f32 to vector<8x256xf32>
    %108 = arith.select %106, %56, %107 : vector<8x256xi1>, vector<8x256xf32>
    %109 = vector.broadcast %102 : vector<8x1xf32> to vector<8x256xf32>
    %110 = arith.mulf %109, %108 : vector<8x256xf32>
    %111 = arith.addf %101, %110 : vector<8x256xf32>
    %112 = vector.extract_strided_slice %4 {offsets = [0, 0], sizes = [8, 1], strides = [1, 1]} : vector<8x5xf32> to vector<8x1xf32>
    %c1_i32_18 = arith.constant 1 : i32
    %113 = vector.broadcast %c1_i32_18 : i32 to vector<1x256xi32>
    %114 = arith.cmpi eq, %21, %113 : vector<1x256xi32>
    %cst_19 = arith.constant 0.000000e+00 : f32
    %115 = vector.shape_cast %114 : vector<1x256xi1> to vector<1x256xi1>
    %116 = vector.broadcast %115 : vector<1x256xi1> to vector<8x256xi1>
    %117 = vector.broadcast %cst_19 : f32 to vector<8x256xf32>
    %118 = arith.select %116, %52, %117 : vector<8x256xi1>, vector<8x256xf32>
    %119 = vector.broadcast %112 : vector<8x1xf32> to vector<8x256xf32>
    %120 = arith.mulf %119, %118 : vector<8x256xf32>
    %121 = arith.addf %111, %120 : vector<8x256xf32>
    %122 = vector.extract_strided_slice %4 {offsets = [0, 1], sizes = [8, 1], strides = [1, 1]} : vector<8x5xf32> to vector<8x1xf32>
    %c0_i32_20 = arith.constant 0 : i32
    %123 = vector.broadcast %c0_i32_20 : i32 to vector<1x256xi32>
    %124 = arith.cmpi eq, %21, %123 : vector<1x256xi32>
    %cst_21 = arith.constant 0.000000e+00 : f32
    %125 = vector.shape_cast %124 : vector<1x256xi1> to vector<1x256xi1>
    %126 = vector.broadcast %125 : vector<1x256xi1> to vector<8x256xi1>
    %127 = vector.broadcast %cst_21 : f32 to vector<8x256xf32>
    %128 = arith.select %126, %55, %127 : vector<8x256xi1>, vector<8x256xf32>
    %129 = vector.broadcast %122 : vector<8x1xf32> to vector<8x256xf32>
    %130 = arith.mulf %129, %128 : vector<8x256xf32>
    %131 = arith.addf %121, %130 : vector<8x256xf32>
    %132 = vector.extract_strided_slice %4 {offsets = [0, 3], sizes = [8, 1], strides = [1, 1]} : vector<8x5xf32> to vector<8x1xf32>
    %c15_i32_22 = arith.constant 15 : i32
    %133 = vector.broadcast %c15_i32_22 : i32 to vector<1x256xi32>
    %134 = arith.cmpi eq, %21, %133 : vector<1x256xi32>
    %cst_23 = arith.constant 0.000000e+00 : f32
    %135 = vector.shape_cast %134 : vector<1x256xi1> to vector<1x256xi1>
    %136 = vector.broadcast %135 : vector<1x256xi1> to vector<8x256xi1>
    %137 = vector.broadcast %cst_23 : f32 to vector<8x256xf32>
    %138 = arith.select %136, %54, %137 : vector<8x256xi1>, vector<8x256xf32>
    %139 = vector.broadcast %132 : vector<8x1xf32> to vector<8x256xf32>
    %140 = arith.mulf %139, %138 : vector<8x256xf32>
    %141 = arith.addf %131, %140 : vector<8x256xf32>
    %142 = vector.extract_strided_slice %4 {offsets = [0, 4], sizes = [8, 1], strides = [1, 1]} : vector<8x5xf32> to vector<8x1xf32>
    %c14_i32_24 = arith.constant 14 : i32
    %143 = vector.broadcast %c14_i32_24 : i32 to vector<1x256xi32>
    %144 = arith.cmpi eq, %21, %143 : vector<1x256xi32>
    %cst_25 = arith.constant 0.000000e+00 : f32
    %145 = vector.shape_cast %144 : vector<1x256xi1> to vector<1x256xi1>
    %146 = vector.broadcast %145 : vector<1x256xi1> to vector<8x256xi1>
    %147 = vector.broadcast %cst_25 : f32 to vector<8x256xf32>
    %148 = arith.select %146, %52, %147 : vector<8x256xi1>, vector<8x256xf32>
    %149 = vector.broadcast %142 : vector<8x1xf32> to vector<8x256xf32>
    %150 = arith.mulf %149, %148 : vector<8x256xf32>
    %151 = arith.addf %141, %150 : vector<8x256xf32>
    %152 = vector.extract_strided_slice %4 {offsets = [0, 4], sizes = [8, 1], strides = [1, 1]} : vector<8x5xf32> to vector<8x1xf32>
    %c15_i32_26 = arith.constant 15 : i32
    %153 = vector.broadcast %c15_i32_26 : i32 to vector<1x256xi32>
    %154 = arith.cmpi eq, %21, %153 : vector<1x256xi32>
    %cst_27 = arith.constant 0.000000e+00 : f32
    %155 = vector.shape_cast %154 : vector<1x256xi1> to vector<1x256xi1>
    %156 = vector.broadcast %155 : vector<1x256xi1> to vector<8x256xi1>
    %157 = vector.broadcast %cst_27 : f32 to vector<8x256xf32>
    %158 = arith.select %156, %53, %157 : vector<8x256xi1>, vector<8x256xf32>
    %159 = vector.broadcast %152 : vector<8x1xf32> to vector<8x256xf32>
    %160 = arith.mulf %159, %158 : vector<8x256xf32>
    %161 = arith.addf %151, %160 : vector<8x256xf32>
    %cst_28 = arith.constant 1.000000e+00 : f32
    %162 = vector.broadcast %cst_28 : f32 to vector<8x256xf32>
    %163 = arith.addf %161, %162 : vector<8x256xf32>
    %164 = math.log %163 : vector<8x256xf32>
    %cst_29 = arith.constant 1.000000e+00 : f32
    %165 = vector.broadcast %cst_29 : f32 to vector<8x256xf32>
    %166 = arith.addf %3, %165 : vector<8x256xf32>
    %167 = math.log %166 : vector<8x256xf32>
    %168 = arith.subf %167, %164 : vector<8x256xf32>
    %c0_30 = arith.constant 0 : index
    %c0_31 = arith.constant 0 : index
    %c0_32 = arith.constant 0 : index
    %169 = vector.load %arg12[%c0_30, %c0_31, %c0_32] : memref<1x8x256xf32, #tpu.memory_space<vmem>>, vector<1x8x256xf32>
    %170 = vector.shape_cast %169 : vector<1x8x256xf32> to vector<8x256xf32>
    %171 = vector.shape_cast %164 : vector<8x256xf32> to vector<1x8x256xf32>
    tpu.vector_store %arg12[%c0_30, %c0_31, %c0_32], %171 {strides = array<i32>} : memref<1x8x256xf32, #tpu.memory_space<vmem>>, vector<1x8x256xf32>,
    %c0_33 = arith.constant 0 : index
    %c0_34 = arith.constant 0 : index
    %172 = vector.load %arg3[%c0_33, %c0_34] : memref<8x72xbf16, #tpu.memory_space<vmem>>, vector<8x72xbf16>
    %c34_i32 = arith.constant 34 : i32
    %173 = tpu.dynamic_rotate %168 by %c34_i32 dim 1 : vector<8x256xf32>, i32 -> vector<8x256xf32>
    %c32_i32 = arith.constant 32 : i32
    %174 = vector.broadcast %c32_i32 : i32 to vector<1x256xi32>
    %175 = arith.cmpi sge, %5, %174 : vector<1x256xi32>
    %cst_35 = arith.constant 0.000000e+00 : f32
    %176 = vector.shape_cast %175 : vector<1x256xi1> to vector<1x256xi1>
    %177 = vector.broadcast %176 : vector<1x256xi1> to vector<8x256xi1>
    %178 = vector.broadcast %cst_35 : f32 to vector<8x256xf32>
    %179 = arith.select %177, %173, %178 : vector<8x256xi1>, vector<8x256xf32>
    %c2_i32_36 = arith.constant 2 : i32
    %180 = vector.broadcast %c2_i32_36 : i32 to vector<1x256xi32>
    %181 = arith.cmpi sge, %21, %180 : vector<1x256xi32>
    %cst_37 = arith.constant 0.000000e+00 : f32
    %182 = vector.shape_cast %181 : vector<1x256xi1> to vector<1x256xi1>
    %183 = vector.broadcast %182 : vector<1x256xi1> to vector<8x256xi1>
    %184 = vector.broadcast %cst_37 : f32 to vector<8x256xf32>
    %185 = arith.select %183, %179, %184 : vector<8x256xi1>, vector<8x256xf32>
    %c32_i32_38 = arith.constant 32 : i32
    %186 = tpu.dynamic_rotate %168 by %c32_i32_38 dim 1 : vector<8x256xf32>, i32 -> vector<8x256xf32>
    %c32_i32_39 = arith.constant 32 : i32
    %187 = vector.broadcast %c32_i32_39 : i32 to vector<1x256xi32>
    %188 = arith.cmpi sge, %5, %187 : vector<1x256xi32>
    %cst_40 = arith.constant 0.000000e+00 : f32
    %189 = vector.shape_cast %188 : vector<1x256xi1> to vector<1x256xi1>
    %190 = vector.broadcast %189 : vector<1x256xi1> to vector<8x256xi1>
    %191 = vector.broadcast %cst_40 : f32 to vector<8x256xf32>
    %192 = arith.select %190, %186, %191 : vector<8x256xi1>, vector<8x256xf32>
    %c30_i32 = arith.constant 30 : i32
    %193 = tpu.dynamic_rotate %168 by %c30_i32 dim 1 : vector<8x256xf32>, i32 -> vector<8x256xf32>
    %c32_i32_41 = arith.constant 32 : i32
    %194 = vector.broadcast %c32_i32_41 : i32 to vector<1x256xi32>
    %195 = arith.cmpi sge, %5, %194 : vector<1x256xi32>
    %cst_42 = arith.constant 0.000000e+00 : f32
    %196 = vector.shape_cast %195 : vector<1x256xi1> to vector<1x256xi1>
    %197 = vector.broadcast %196 : vector<1x256xi1> to vector<8x256xi1>
    %198 = vector.broadcast %cst_42 : f32 to vector<8x256xf32>
    %199 = arith.select %197, %193, %198 : vector<8x256xi1>, vector<8x256xf32>
    %c14_i32_43 = arith.constant 14 : i32
    %200 = vector.broadcast %c14_i32_43 : i32 to vector<1x256xi32>
    %201 = arith.cmpi slt, %21, %200 : vector<1x256xi32>
    %cst_44 = arith.constant 0.000000e+00 : f32
    %202 = vector.shape_cast %201 : vector<1x256xi1> to vector<1x256xi1>
    %203 = vector.broadcast %202 : vector<1x256xi1> to vector<8x256xi1>
    %204 = vector.broadcast %cst_44 : f32 to vector<8x256xf32>
    %205 = arith.select %203, %199, %204 : vector<8x256xi1>, vector<8x256xf32>
    %c2_i32_45 = arith.constant 2 : i32
    %206 = tpu.dynamic_rotate %168 by %c2_i32_45 dim 1 : vector<8x256xf32>, i32 -> vector<8x256xf32>
    %c2_i32_46 = arith.constant 2 : i32
    %207 = vector.broadcast %c2_i32_46 : i32 to vector<1x256xi32>
    %208 = arith.cmpi sge, %21, %207 : vector<1x256xi32>
    %cst_47 = arith.constant 0.000000e+00 : f32
    %209 = vector.shape_cast %208 : vector<1x256xi1> to vector<1x256xi1>
    %210 = vector.broadcast %209 : vector<1x256xi1> to vector<8x256xi1>
    %211 = vector.broadcast %cst_47 : f32 to vector<8x256xf32>
    %212 = arith.select %210, %206, %211 : vector<8x256xi1>, vector<8x256xf32>
    %c254_i32_48 = arith.constant 254 : i32
    %213 = tpu.dynamic_rotate %168 by %c254_i32_48 dim 1 : vector<8x256xf32>, i32 -> vector<8x256xf32>
    %c14_i32_49 = arith.constant 14 : i32
    %214 = vector.broadcast %c14_i32_49 : i32 to vector<1x256xi32>
    %215 = arith.cmpi slt, %21, %214 : vector<1x256xi32>
    %cst_50 = arith.constant 0.000000e+00 : f32
    %216 = vector.shape_cast %215 : vector<1x256xi1> to vector<1x256xi1>
    %217 = vector.broadcast %216 : vector<1x256xi1> to vector<8x256xi1>
    %218 = vector.broadcast %cst_50 : f32 to vector<8x256xf32>
    %219 = arith.select %217, %213, %218 : vector<8x256xi1>, vector<8x256xf32>
    %c226_i32 = arith.constant 226 : i32
    %220 = tpu.dynamic_rotate %168 by %c226_i32 dim 1 : vector<8x256xf32>, i32 -> vector<8x256xf32>
    %c224_i32 = arith.constant 224 : i32
    %221 = vector.broadcast %c224_i32 : i32 to vector<1x256xi32>
    %222 = arith.cmpi slt, %5, %221 : vector<1x256xi32>
    %cst_51 = arith.constant 0.000000e+00 : f32
    %223 = vector.shape_cast %222 : vector<1x256xi1> to vector<1x256xi1>
    %224 = vector.broadcast %223 : vector<1x256xi1> to vector<8x256xi1>
    %225 = vector.broadcast %cst_51 : f32 to vector<8x256xf32>
    %226 = arith.select %224, %220, %225 : vector<8x256xi1>, vector<8x256xf32>
    %c2_i32_52 = arith.constant 2 : i32
    %227 = vector.broadcast %c2_i32_52 : i32 to vector<1x256xi32>
    %228 = arith.cmpi sge, %21, %227 : vector<1x256xi32>
    %cst_53 = arith.constant 0.000000e+00 : f32
    %229 = vector.shape_cast %228 : vector<1x256xi1> to vector<1x256xi1>
    %230 = vector.broadcast %229 : vector<1x256xi1> to vector<8x256xi1>
    %231 = vector.broadcast %cst_53 : f32 to vector<8x256xf32>
    %232 = arith.select %230, %226, %231 : vector<8x256xi1>, vector<8x256xf32>
    %c224_i32_54 = arith.constant 224 : i32
    %233 = tpu.dynamic_rotate %168 by %c224_i32_54 dim 1 : vector<8x256xf32>, i32 -> vector<8x256xf32>
    %c224_i32_55 = arith.constant 224 : i32
    %234 = vector.broadcast %c224_i32_55 : i32 to vector<1x256xi32>
    %235 = arith.cmpi slt, %5, %234 : vector<1x256xi32>
    %cst_56 = arith.constant 0.000000e+00 : f32
    %236 = vector.shape_cast %235 : vector<1x256xi1> to vector<1x256xi1>
    %237 = vector.broadcast %236 : vector<1x256xi1> to vector<8x256xi1>
    %238 = vector.broadcast %cst_56 : f32 to vector<8x256xf32>
    %239 = arith.select %237, %233, %238 : vector<8x256xi1>, vector<8x256xf32>
    %c222_i32 = arith.constant 222 : i32
    %240 = tpu.dynamic_rotate %168 by %c222_i32 dim 1 : vector<8x256xf32>, i32 -> vector<8x256xf32>
    %c224_i32_57 = arith.constant 224 : i32
    %241 = vector.broadcast %c224_i32_57 : i32 to vector<1x256xi32>
    %242 = arith.cmpi slt, %5, %241 : vector<1x256xi32>
    %cst_58 = arith.constant 0.000000e+00 : f32
    %243 = vector.shape_cast %242 : vector<1x256xi1> to vector<1x256xi1>
    %244 = vector.broadcast %243 : vector<1x256xi1> to vector<8x256xi1>
    %245 = vector.broadcast %cst_58 : f32 to vector<8x256xf32>
    %246 = arith.select %244, %240, %245 : vector<8x256xi1>, vector<8x256xf32>
    %c14_i32_59 = arith.constant 14 : i32
    %247 = vector.broadcast %c14_i32_59 : i32 to vector<1x256xi32>
    %248 = arith.cmpi slt, %21, %247 : vector<1x256xi32>
    %cst_60 = arith.constant 0.000000e+00 : f32
    %249 = vector.shape_cast %248 : vector<1x256xi1> to vector<1x256xi1>
    %250 = vector.broadcast %249 : vector<1x256xi1> to vector<8x256xi1>
    %251 = vector.broadcast %cst_60 : f32 to vector<8x256xf32>
    %252 = arith.select %250, %246, %251 : vector<8x256xi1>, vector<8x256xf32>
    %253 = tpu.concatenate %185, %192, %205, %212, %168, %219, %232, %239, %252 in 0 : vector<8x256xf32>, vector<8x256xf32>, vector<8x256xf32>, vector<8x256xf32>, vector<8x256xf32>, vector<8x256xf32>, vector<8x256xf32>, vector<8x256xf32>, vector<8x256xf32> -> vector<72x256xf32>
    %254 = arith.truncf %253 : vector<72x256xf32> to vector<72x256xbf16>
    %cst_61 = arith.constant dense<0.000000e+00> : vector<8x256xf32>
    %255 = tpu.matmul %172, %254, %cst_61 {dimension_numbers = #tpu.dot_dimension_numbers<[1], [0], [0], [1], [0, 0, 1, 1], [], []>} : vector<8x72xbf16>, vector<72x256xbf16>, vector<8x256xf32> -> vector<8x256xf32>
    %c0_62 = arith.constant 0 : index
    %c0_63 = arith.constant 0 : index
    %256 = vector.load %arg4[%c0_62, %c0_63] : memref<8x1xf32, #tpu.memory_space<vmem>>, vector<8x1xf32>
    %257 = vector.broadcast %256 : vector<8x1xf32> to vector<8x256xf32>
    %258 = arith.addf %255, %257 : vector<8x256xf32>
    %cst_64 = arith.constant 0.000000e+00 : f32
    %259 = vector.broadcast %cst_64 : f32 to vector<8x256xf32>
    %260 = arith.maximumf %258, %259 : vector<8x256xf32>
    %c0_65 = arith.constant 0 : index
    %c0_66 = arith.constant 0 : index
    %261 = vector.load %arg5[%c0_65, %c0_66] : memref<8x72xbf16, #tpu.memory_space<vmem>>, vector<8x72xbf16>
    %c34_i32_67 = arith.constant 34 : i32
    %262 = tpu.dynamic_rotate %260 by %c34_i32_67 dim 1 : vector<8x256xf32>, i32 -> vector<8x256xf32>
    %c32_i32_68 = arith.constant 32 : i32
    %263 = vector.broadcast %c32_i32_68 : i32 to vector<1x256xi32>
    %264 = arith.cmpi sge, %5, %263 : vector<1x256xi32>
    %cst_69 = arith.constant 0.000000e+00 : f32
    %265 = vector.shape_cast %264 : vector<1x256xi1> to vector<1x256xi1>
    %266 = vector.broadcast %265 : vector<1x256xi1> to vector<8x256xi1>
    %267 = vector.broadcast %cst_69 : f32 to vector<8x256xf32>
    %268 = arith.select %266, %262, %267 : vector<8x256xi1>, vector<8x256xf32>
    %c2_i32_70 = arith.constant 2 : i32
    %269 = vector.broadcast %c2_i32_70 : i32 to vector<1x256xi32>
    %270 = arith.cmpi sge, %21, %269 : vector<1x256xi32>
    %cst_71 = arith.constant 0.000000e+00 : f32
    %271 = vector.shape_cast %270 : vector<1x256xi1> to vector<1x256xi1>
    %272 = vector.broadcast %271 : vector<1x256xi1> to vector<8x256xi1>
    %273 = vector.broadcast %cst_71 : f32 to vector<8x256xf32>
    %274 = arith.select %272, %268, %273 : vector<8x256xi1>, vector<8x256xf32>
    %c32_i32_72 = arith.constant 32 : i32
    %275 = tpu.dynamic_rotate %260 by %c32_i32_72 dim 1 : vector<8x256xf32>, i32 -> vector<8x256xf32>
    %c32_i32_73 = arith.constant 32 : i32
    %276 = vector.broadcast %c32_i32_73 : i32 to vector<1x256xi32>
    %277 = arith.cmpi sge, %5, %276 : vector<1x256xi32>
    %cst_74 = arith.constant 0.000000e+00 : f32
    %278 = vector.shape_cast %277 : vector<1x256xi1> to vector<1x256xi1>
    %279 = vector.broadcast %278 : vector<1x256xi1> to vector<8x256xi1>
    %280 = vector.broadcast %cst_74 : f32 to vector<8x256xf32>
    %281 = arith.select %279, %275, %280 : vector<8x256xi1>, vector<8x256xf32>
    %c30_i32_75 = arith.constant 30 : i32
    %282 = tpu.dynamic_rotate %260 by %c30_i32_75 dim 1 : vector<8x256xf32>, i32 -> vector<8x256xf32>
    %c32_i32_76 = arith.constant 32 : i32
    %283 = vector.broadcast %c32_i32_76 : i32 to vector<1x256xi32>
    %284 = arith.cmpi sge, %5, %283 : vector<1x256xi32>
    %cst_77 = arith.constant 0.000000e+00 : f32
    %285 = vector.shape_cast %284 : vector<1x256xi1> to vector<1x256xi1>
    %286 = vector.broadcast %285 : vector<1x256xi1> to vector<8x256xi1>
    %287 = vector.broadcast %cst_77 : f32 to vector<8x256xf32>
    %288 = arith.select %286, %282, %287 : vector<8x256xi1>, vector<8x256xf32>
    %c14_i32_78 = arith.constant 14 : i32
    %289 = vector.broadcast %c14_i32_78 : i32 to vector<1x256xi32>
    %290 = arith.cmpi slt, %21, %289 : vector<1x256xi32>
    %cst_79 = arith.constant 0.000000e+00 : f32
    %291 = vector.shape_cast %290 : vector<1x256xi1> to vector<1x256xi1>
    %292 = vector.broadcast %291 : vector<1x256xi1> to vector<8x256xi1>
    %293 = vector.broadcast %cst_79 : f32 to vector<8x256xf32>
    %294 = arith.select %292, %288, %293 : vector<8x256xi1>, vector<8x256xf32>
    %c2_i32_80 = arith.constant 2 : i32
    %295 = tpu.dynamic_rotate %260 by %c2_i32_80 dim 1 : vector<8x256xf32>, i32 -> vector<8x256xf32>
    %c2_i32_81 = arith.constant 2 : i32
    %296 = vector.broadcast %c2_i32_81 : i32 to vector<1x256xi32>
    %297 = arith.cmpi sge, %21, %296 : vector<1x256xi32>
    %cst_82 = arith.constant 0.000000e+00 : f32
    %298 = vector.shape_cast %297 : vector<1x256xi1> to vector<1x256xi1>
    %299 = vector.broadcast %298 : vector<1x256xi1> to vector<8x256xi1>
    %300 = vector.broadcast %cst_82 : f32 to vector<8x256xf32>
    %301 = arith.select %299, %295, %300 : vector<8x256xi1>, vector<8x256xf32>
    %c254_i32_83 = arith.constant 254 : i32
    %302 = tpu.dynamic_rotate %260 by %c254_i32_83 dim 1 : vector<8x256xf32>, i32 -> vector<8x256xf32>
    %c14_i32_84 = arith.constant 14 : i32
    %303 = vector.broadcast %c14_i32_84 : i32 to vector<1x256xi32>
    %304 = arith.cmpi slt, %21, %303 : vector<1x256xi32>
    %cst_85 = arith.constant 0.000000e+00 : f32
    %305 = vector.shape_cast %304 : vector<1x256xi1> to vector<1x256xi1>
    %306 = vector.broadcast %305 : vector<1x256xi1> to vector<8x256xi1>
    %307 = vector.broadcast %cst_85 : f32 to vector<8x256xf32>
    %308 = arith.select %306, %302, %307 : vector<8x256xi1>, vector<8x256xf32>
    %c226_i32_86 = arith.constant 226 : i32
    %309 = tpu.dynamic_rotate %260 by %c226_i32_86 dim 1 : vector<8x256xf32>, i32 -> vector<8x256xf32>
    %c224_i32_87 = arith.constant 224 : i32
    %310 = vector.broadcast %c224_i32_87 : i32 to vector<1x256xi32>
    %311 = arith.cmpi slt, %5, %310 : vector<1x256xi32>
    %cst_88 = arith.constant 0.000000e+00 : f32
    %312 = vector.shape_cast %311 : vector<1x256xi1> to vector<1x256xi1>
    %313 = vector.broadcast %312 : vector<1x256xi1> to vector<8x256xi1>
    %314 = vector.broadcast %cst_88 : f32 to vector<8x256xf32>
    %315 = arith.select %313, %309, %314 : vector<8x256xi1>, vector<8x256xf32>
    %c2_i32_89 = arith.constant 2 : i32
    %316 = vector.broadcast %c2_i32_89 : i32 to vector<1x256xi32>
    %317 = arith.cmpi sge, %21, %316 : vector<1x256xi32>
    %cst_90 = arith.constant 0.000000e+00 : f32
    %318 = vector.shape_cast %317 : vector<1x256xi1> to vector<1x256xi1>
    %319 = vector.broadcast %318 : vector<1x256xi1> to vector<8x256xi1>
    %320 = vector.broadcast %cst_90 : f32 to vector<8x256xf32>
    %321 = arith.select %319, %315, %320 : vector<8x256xi1>, vector<8x256xf32>
    %c224_i32_91 = arith.constant 224 : i32
    %322 = tpu.dynamic_rotate %260 by %c224_i32_91 dim 1 : vector<8x256xf32>, i32 -> vector<8x256xf32>
    %c224_i32_92 = arith.constant 224 : i32
    %323 = vector.broadcast %c224_i32_92 : i32 to vector<1x256xi32>
    %324 = arith.cmpi slt, %5, %323 : vector<1x256xi32>
    %cst_93 = arith.constant 0.000000e+00 : f32
    %325 = vector.shape_cast %324 : vector<1x256xi1> to vector<1x256xi1>
    %326 = vector.broadcast %325 : vector<1x256xi1> to vector<8x256xi1>
    %327 = vector.broadcast %cst_93 : f32 to vector<8x256xf32>
    %328 = arith.select %326, %322, %327 : vector<8x256xi1>, vector<8x256xf32>
    %c222_i32_94 = arith.constant 222 : i32
    %329 = tpu.dynamic_rotate %260 by %c222_i32_94 dim 1 : vector<8x256xf32>, i32 -> vector<8x256xf32>
    %c224_i32_95 = arith.constant 224 : i32
    %330 = vector.broadcast %c224_i32_95 : i32 to vector<1x256xi32>
    %331 = arith.cmpi slt, %5, %330 : vector<1x256xi32>
    %cst_96 = arith.constant 0.000000e+00 : f32
    %332 = vector.shape_cast %331 : vector<1x256xi1> to vector<1x256xi1>
    %333 = vector.broadcast %332 : vector<1x256xi1> to vector<8x256xi1>
    %334 = vector.broadcast %cst_96 : f32 to vector<8x256xf32>
    %335 = arith.select %333, %329, %334 : vector<8x256xi1>, vector<8x256xf32>
    %c14_i32_97 = arith.constant 14 : i32
    %336 = vector.broadcast %c14_i32_97 : i32 to vector<1x256xi32>
    %337 = arith.cmpi slt, %21, %336 : vector<1x256xi32>
    %cst_98 = arith.constant 0.000000e+00 : f32
    %338 = vector.shape_cast %337 : vector<1x256xi1> to vector<1x256xi1>
    %339 = vector.broadcast %338 : vector<1x256xi1> to vector<8x256xi1>
    %340 = vector.broadcast %cst_98 : f32 to vector<8x256xf32>
    %341 = arith.select %339, %335, %340 : vector<8x256xi1>, vector<8x256xf32>
    %342 = tpu.concatenate %274, %281, %294, %301, %260, %308, %321, %328, %341 in 0 : vector<8x256xf32>, vector<8x256xf32>, vector<8x256xf32>, vector<8x256xf32>, vector<8x256xf32>, vector<8x256xf32>, vector<8x256xf32>, vector<8x256xf32>, vector<8x256xf32> -> vector<72x256xf32>
    %343 = arith.truncf %342 : vector<72x256xf32> to vector<72x256xbf16>
    %cst_99 = arith.constant dense<0.000000e+00> : vector<8x256xf32>
    %344 = tpu.matmul %261, %343, %cst_99 {dimension_numbers = #tpu.dot_dimension_numbers<[1], [0], [0], [1], [0, 0, 1, 1], [], []>} : vector<8x72xbf16>, vector<72x256xbf16>, vector<8x256xf32> -> vector<8x256xf32>
    %c0_100 = arith.constant 0 : index
    %c0_101 = arith.constant 0 : index
    %345 = vector.load %arg6[%c0_100, %c0_101] : memref<8x1xf32, #tpu.memory_space<vmem>>, vector<8x1xf32>
    %346 = vector.broadcast %345 : vector<8x1xf32> to vector<8x256xf32>
    %347 = arith.addf %344, %346 : vector<8x256xf32>
    %cst_102 = arith.constant 0.000000e+00 : f32
    %348 = vector.broadcast %cst_102 : f32 to vector<8x256xf32>
    %349 = arith.maximumf %347, %348 : vector<8x256xf32>
    %350 = arith.addf %349, %168 : vector<8x256xf32>
    %c0_103 = arith.constant 0 : index
    %c0_104 = arith.constant 0 : index
    %351 = vector.load %arg7[%c0_103, %c0_104] : memref<8x8xbf16, #tpu.memory_space<vmem>>, vector<8x8xbf16>
    %352 = arith.truncf %164 : vector<8x256xf32> to vector<8x256xbf16>
    %cst_105 = arith.constant dense<0.000000e+00> : vector<8x256xf32>
    %353 = tpu.matmul %351, %352, %cst_105 {dimension_numbers = #tpu.dot_dimension_numbers<[1], [0], [0], [1], [0, 0, 1, 1], [], []>} : vector<8x8xbf16>, vector<8x256xbf16>, vector<8x256xf32> -> vector<8x256xf32>
    %c0_106 = arith.constant 0 : index
    %c0_107 = arith.constant 0 : index
    %354 = vector.load %arg8[%c0_106, %c0_107] : memref<8x1xf32, #tpu.memory_space<vmem>>, vector<8x1xf32>
    %355 = vector.broadcast %354 : vector<8x1xf32> to vector<8x256xf32>
    %356 = arith.addf %353, %355 : vector<8x256xf32>
    %cst_108 = arith.constant 0.000000e+00 : f32
    %357 = vector.broadcast %cst_108 : f32 to vector<8x256xf32>
    %358 = arith.maximumf %356, %357 : vector<8x256xf32>
    %359 = tpu.concatenate %350, %358 in 0 : vector<8x256xf32>, vector<8x256xf32> -> vector<16x256xf32>
    %360 = arith.truncf %359 : vector<16x256xf32> to vector<16x256xbf16>
    %c0_109 = arith.constant 0 : index
    %c0_110 = arith.constant 0 : index
    %361 = vector.load %arg9[%c0_109, %c0_110] : memref<8x16xbf16, #tpu.memory_space<vmem>>, vector<8x16xbf16>
    %cst_111 = arith.constant dense<0.000000e+00> : vector<8x256xf32>
    %362 = tpu.matmul %361, %360, %cst_111 {dimension_numbers = #tpu.dot_dimension_numbers<[1], [0], [0], [1], [0, 0, 1, 1], [], []>} : vector<8x16xbf16>, vector<16x256xbf16>, vector<8x256xf32> -> vector<8x256xf32>
    %c0_112 = arith.constant 0 : index
    %c0_113 = arith.constant 0 : index
    %363 = vector.load %arg10[%c0_112, %c0_113] : memref<8x1xf32, #tpu.memory_space<vmem>>, vector<8x1xf32>
    %364 = vector.broadcast %363 : vector<8x1xf32> to vector<8x256xf32>
    %365 = arith.addf %362, %364 : vector<8x256xf32>
    %cst_114 = arith.constant 0.000000e+00 : f32
    %366 = vector.broadcast %cst_114 : f32 to vector<8x256xf32>
    %367 = arith.maximumf %365, %366 : vector<8x256xf32>
    %c0_115 = arith.constant 0 : index
    %c0_116 = arith.constant 0 : index
    %c0_117 = arith.constant 0 : index
    %368 = vector.load %arg11[%c0_115, %c0_116, %c0_117] : memref<1x8x256xf32, #tpu.memory_space<vmem>>, vector<1x8x256xf32>
    %369 = vector.shape_cast %368 : vector<1x8x256xf32> to vector<8x256xf32>
    %370 = vector.shape_cast %367 : vector<8x256xf32> to vector<1x8x256xf32>
    tpu.vector_store %arg11[%c0_115, %c0_116, %c0_117], %370 {strides = array<i32>} : memref<1x8x256xf32, #tpu.memory_space<vmem>>, vector<1x8x256xf32>,
    return
  }
  func.func @transform_0(%arg0: i32) -> (i32, i32, i32) {
    %c0_i32 = arith.constant 0 : i32
    %c0_i32_0 = arith.constant 0 : i32
    %c0_i32_1 = arith.constant 0 : i32
    return %arg0, %c0_i32, %c0_i32_0 : i32, i32, i32
  }
  func.func @transform_1(%arg0: i32) -> (i32, i32) {
    %c0_i32 = arith.constant 0 : i32
    %c0_i32_0 = arith.constant 0 : i32
    %c0_i32_1 = arith.constant 0 : i32
    return %c0_i32, %c0_i32_0 : i32, i32
  }
  func.func @transform_2(%arg0: i32) -> (i32, i32) {
    %c0_i32 = arith.constant 0 : i32
    %c0_i32_0 = arith.constant 0 : i32
    %c0_i32_1 = arith.constant 0 : i32
    return %c0_i32, %c0_i32_0 : i32, i32
  }
  func.func @transform_3(%arg0: i32) -> (i32, i32) {
    %c0_i32 = arith.constant 0 : i32
    %c0_i32_0 = arith.constant 0 : i32
    %c0_i32_1 = arith.constant 0 : i32
    return %c0_i32, %c0_i32_0 : i32, i32
  }
  func.func @transform_4(%arg0: i32) -> (i32, i32) {
    %c0_i32 = arith.constant 0 : i32
    %c0_i32_0 = arith.constant 0 : i32
    %c0_i32_1 = arith.constant 0 : i32
    return %c0_i32, %c0_i32_0 : i32, i32
  }
  func.func @transform_5(%arg0: i32) -> (i32, i32) {
    %c0_i32 = arith.constant 0 : i32
    %c0_i32_0 = arith.constant 0 : i32
    %c0_i32_1 = arith.constant 0 : i32
    return %c0_i32, %c0_i32_0 : i32, i32
  }
  func.func @transform_6(%arg0: i32) -> (i32, i32) {
    %c0_i32 = arith.constant 0 : i32
    %c0_i32_0 = arith.constant 0 : i32
    %c0_i32_1 = arith.constant 0 : i32
    return %c0_i32, %c0_i32_0 : i32, i32
  }
  func.func @transform_7(%arg0: i32) -> (i32, i32) {
    %c0_i32 = arith.constant 0 : i32
    %c0_i32_0 = arith.constant 0 : i32
    %c0_i32_1 = arith.constant 0 : i32
    return %c0_i32, %c0_i32_0 : i32, i32
  }
  func.func @transform_8(%arg0: i32) -> (i32, i32) {
    %c0_i32 = arith.constant 0 : i32
    %c0_i32_0 = arith.constant 0 : i32
    %c0_i32_1 = arith.constant 0 : i32
    return %c0_i32, %c0_i32_0 : i32, i32
  }
  func.func @transform_9(%arg0: i32) -> (i32, i32) {
    %c0_i32 = arith.constant 0 : i32
    %c0_i32_0 = arith.constant 0 : i32
    %c0_i32_1 = arith.constant 0 : i32
    return %c0_i32, %c0_i32_0 : i32, i32
  }
  func.func @transform_10(%arg0: i32) -> (i32, i32, i32) {
    %c0_i32 = arith.constant 0 : i32
    %c0_i32_0 = arith.constant 0 : i32
    %c0_i32_1 = arith.constant 0 : i32
    return %arg0, %c0_i32, %c0_i32_0 : i32, i32, i32
  }
  func.func @transform_11(%arg0: i32) -> (i32, i32, i32) {
    %c0_i32 = arith.constant 0 : i32
    %c0_i32_0 = arith.constant 0 : i32
    %c0_i32_1 = arith.constant 0 : i32
    return %arg0, %c0_i32, %c0_i32_0 : i32, i32, i32
  }
}

</mosaic_0001>

<llo_original>
// kernel: reverse
$region0: #{reverse}
  %s0 = inlined_call_operand.vmem [shape: f32[8,2], index: 0, kind: input, shape index: {}]
  %s1 = inlined_call_operand.vmem [shape: f32[8,2], index: 1, kind: output, shape index: {}]
  %v2 = vlaneseq
  %v3 = vsub.s32 1, %v2
  %4 = vset.pattern.permute.xlu0 %v3
  $region1: #{reverse} parent=0
    #allocation0 [shape = 'u8[4096]{0}', space=vmem, size = 0x1000, scoped, tag = 'operand span for operand 0']
    #allocation1 [shape = 'u8[4096]{0}', space=vmem, size = 0x1000, scoped, tag = 'operand span for operand 1']
    // Predicated region
    $region2: #{reverse} parent=1 // pred_check
      _
    $region3: #{reverse} parent=1 // pred_check_branch
      %6 = sbr.rel (0) target = $region5
    $region4: #{reverse} parent=1 // pred_region
      // Predicated region
      $region6: #{reverse} parent=4 // pred_check
        _
      $region7: #{reverse} parent=4 // pred_check_branch
        %8 = sbr.rel (0) target = $region9
      $region8: #{reverse} parent=4 // pred_region
        // Predicated region
        $region21: #{reverse} parent=8 // pred_check
          _
        $region22: #{reverse} parent=8 // pred_check_branch
          %23 = sbr.rel (0) target = $region24
        $region23: #{reverse} parent=8 // pred_region
          loop: start=0, step=1, limit=1
          $region25: #{reverse} parent=23 // loop_pre_header
            _
          $region26: #{reverse} parent=23 // loop_header
            %s25 = sphi 0, %s29
            %p26 = scmp.ge.s32.totalorder %s25, 1
            %s30 = sphi %s0, %s0
            %s31 = sphi [#allocation0], [#allocation0]
          $region27: #{reverse} parent=23 // loop_header_branch
            %28 = sbr.rel (%p26) target = $region31
          $region28: #{reverse} parent=23 // loop_body
            %v32 = vld [vmem:[%s30] sm:$0xff]
            %33 = vst [vmem:[%s31] sm:$0xff] %v32
          $region29: #{reverse} parent=23 // loop_footer
            %s29 = sadd.s32 1, %s25
          $region30: #{reverse} parent=23 // loop_footer_branch
            %24 = sbr.rel target = $region26
          $region31: #{reverse} parent=23 // loop_exit
            _
        $region24: #{reverse} parent=8 // pred_fallthru
          _
        // Predicated region
        $region32: #{reverse} parent=8 // pred_check
          _
        $region33: #{reverse} parent=8 // pred_check_branch
          %35 = sbr.rel target = $region35
        $region34: #{reverse} parent=8 // pred_region
          _
        $region35: #{reverse} parent=8 // pred_fallthru
          _
      $region9: #{reverse} parent=4 // pred_fallthru
        _
      // Predicated region
      $region10: #{reverse} parent=4 // pred_check
        _
      $region11: #{reverse} parent=4 // pred_check_branch
        %10 = sbr.rel target = $region13
      $region12: #{reverse} parent=4 // pred_region
        loop: start=0, step=1, limit=1
        $region14: #{reverse} parent=12 // loop_pre_header
          _
        $region15: #{reverse} parent=12 // loop_header
          %s13 = sphi 0, %s17
          %p14 = scmp.ge.s32.totalorder %s13, 1
          %s18 = sphi %s0, %s0
          %s19 = sphi [#allocation0], [#allocation0]
        $region16: #{reverse} parent=12 // loop_header_branch
          %16 = sbr.rel (%p14) target = $region20
        $region17: #{reverse} parent=12 // loop_body
          %v20 = vld [vmem:[%s18] sm:$0xff]
          %21 = vst [vmem:[%s19] sm:$0xff] %v20
        $region18: #{reverse} parent=12 // loop_footer
          %s17 = sadd.s32 1, %s13
        $region19: #{reverse} parent=12 // loop_footer_branch
          %12 = sbr.rel target = $region15
        $region20: #{reverse} parent=12 // loop_exit
          _
      $region13: #{reverse} parent=4 // pred_fallthru
        _
    $region5: #{reverse} parent=1 // pred_fallthru
      _
    %36 = vnop
    %v37 = vld [vmem:[#allocation0] sm:$0xff]
    %38 = vperm.xlu0 %4, %v37
    %v39 = vpop.permute.xlu0 %38
    %40 = vst [vmem:[#allocation1] sm:$0xff] %v39
    // Predicated region
    $region36: #{reverse} parent=1 // pred_check
      _
    $region37: #{reverse} parent=1 // pred_check_branch
      %42 = sbr.rel (0) target = $region39
    $region38: #{reverse} parent=1 // pred_region
      // Predicated region
      $region40: #{reverse} parent=38 // pred_check
        _
      $region41: #{reverse} parent=38 // pred_check_branch
        %44 = sbr.rel (0) target = $region43
      $region42: #{reverse} parent=38 // pred_region
        // Predicated region
        $region55: #{reverse} parent=42 // pred_check
          _
        $region56: #{reverse} parent=42 // pred_check_branch
          %59 = sbr.rel (0) target = $region58
        $region57: #{reverse} parent=42 // pred_region
          loop: start=0, step=1, limit=1
          $region59: #{reverse} parent=57 // loop_pre_header
            _
          $region60: #{reverse} parent=57 // loop_header
            %s61 = sphi 0, %s65
            %p62 = scmp.ge.s32.totalorder %s61, 1
            %s66 = sphi [#allocation1], [#allocation1]
            %s67 = sphi %s1, %s1
          $region61: #{reverse} parent=57 // loop_header_branch
            %64 = sbr.rel (%p62) target = $region65
          $region62: #{reverse} parent=57 // loop_body
            %v68 = vld [vmem:[%s66] sm:$0xff]
            %69 = vst [vmem:[%s67] sm:$0xff] %v68
          $region63: #{reverse} parent=57 // loop_footer
            %s65 = sadd.s32 1, %s61
          $region64: #{reverse} parent=57 // loop_footer_branch
            %60 = sbr.rel target = $region60
          $region65: #{reverse} parent=57 // loop_exit
            _
        $region58: #{reverse} parent=42 // pred_fallthru
          _
        // Predicated region
        $region66: #{reverse} parent=42 // pred_check
          _
        $region67: #{reverse} parent=42 // pred_check_branch
          %71 = sbr.rel target = $region69
        $region68: #{reverse} parent=42 // pred_region
          _
        $region69: #{reverse} parent=42 // pred_fallthru
          _
      $region43: #{reverse} parent=38 // pred_fallthru
        _
      // Predicated region
      $region44: #{reverse} parent=38 // pred_check
        _
      $region45: #{reverse} parent=38 // pred_check_branch
        %46 = sbr.rel target = $region47
      $region46: #{reverse} parent=38 // pred_region
        loop: start=0, step=1, limit=1
        $region48: #{reverse} parent=46 // loop_pre_header
          _
        $region49: #{reverse} parent=46 // loop_header
          %s49 = sphi 0, %s53
          %p50 = scmp.ge.s32.totalorder %s49, 1
          %s54 = sphi [#allocation1], [#allocation1]
          %s55 = sphi %s1, %s1
        $region50: #{reverse} parent=46 // loop_header_branch
          %52 = sbr.rel (%p50) target = $region54
        $region51: #{reverse} parent=46 // loop_body
          %v56 = vld [vmem:[%s54] sm:$0xff]
          %57 = vst [vmem:[%s55] sm:$0xff] %v56
        $region52: #{reverse} parent=46 // loop_footer
          %s53 = sadd.s32 1, %s49
        $region53: #{reverse} parent=46 // loop_footer_branch
          %48 = sbr.rel target = $region49
        $region54: #{reverse} parent=46 // loop_exit
          _
      $region47: #{reverse} parent=38 // pred_fallthru
        _
    $region39: #{reverse} parent=1 // pred_fallthru
      _
    %72 = vnop

// kernel: arblock_forward.1
$region0: #{arblock_forward.1}
  #allocation0 [shape = 'u32[]', space=smem, size = 0x4, offset = 0x4, fixed_abs, tag = 'smem constant byte address 0x4 - core index']
  #allocation1 [shape = 'u32[144,128]{1,0:T(1,128)}', space=vmem, size = 0x12000, scoped, tag = 'internal scratch']
  %s0 = inlined_call_operand.vmem [shape: f32[2,8,256], index: 0, kind: input, shape index: {}]
  %s1 = inlined_call_operand.vmem [shape: f32[8,5], index: 1, kind: input, shape index: {}]
  %s2 = inlined_call_operand.vmem [shape: bf16[8,72], index: 2, kind: input, shape index: {}]
  %s3 = inlined_call_operand.vmem [shape: f32[8,1], index: 3, kind: input, shape index: {}]
  %s4 = inlined_call_operand.vmem [shape: bf16[8,72], index: 4, kind: input, shape index: {}]
  %s5 = inlined_call_operand.vmem [shape: f32[8,1], index: 5, kind: input, shape index: {}]
  %s6 = inlined_call_operand.vmem [shape: bf16[8,8], index: 6, kind: input, shape index: {}]
  %s7 = inlined_call_operand.vmem [shape: f32[8,1], index: 7, kind: input, shape index: {}]
  %s8 = inlined_call_operand.vmem [shape: bf16[8,16], index: 8, kind: input, shape index: {}]
  %s9 = inlined_call_operand.vmem [shape: f32[8,1], index: 9, kind: input, shape index: {}]
  %s10 = inlined_call_operand.vmem [shape: f32[2,8,256], index: 10, kind: output, shape index: {0}]
  %s11 = inlined_call_operand.vmem [shape: f32[2,8,256], index: 11, kind: output, shape index: {1}]
  %12 = xla_tuple %s10, %s11
  %s13 = sld [smem:[#allocation0]]
  $region81: #{arblock_forward.1} parent=0
    _
  %s15 = ssub.s32 1, %s13
  %s16 = scalar_select 0, %s15, %s13
  loop: start=0, step=1, limit=4
  $region2: #{arblock_forward.1} parent=0 // loop_pre_header
    _
  $region3: #{arblock_forward.1} parent=0 // loop_header
    %s18 = sphi 0, %s22
    %p19 = scmp.ge.s32.totalorder %s18, 4
    %s28 = sphi 0, %s30
    %s31 = sphi 0, %s28
    %s32 = sphi 0, %s31
    %s48 = sphi 0, %s32
    %s52 = sphi 0, %s52
    %s54 = sphi 0, %s52
    %s55 = sphi 0, %s54
    %s69 = sphi 0, %s55
    %s73 = sphi 0, %s73
    %s75 = sphi 0, %s73
    %s76 = sphi 0, %s75
    %s90 = sphi 0, %s76
    %s94 = sphi 0, %s94
    %s96 = sphi 0, %s94
    %s97 = sphi 0, %s96
    %s111 = sphi 0, %s97
    %s115 = sphi 0, %s115
    %s117 = sphi 0, %s115
    %s118 = sphi 0, %s117
    %s132 = sphi 0, %s118
    %s136 = sphi 0, %s136
    %s138 = sphi 0, %s136
    %s139 = sphi 0, %s138
    %s153 = sphi 0, %s139
    %s157 = sphi 0, %s157
    %s159 = sphi 0, %s157
    %s160 = sphi 0, %s159
    %s174 = sphi 0, %s160
    %s178 = sphi 0, %s178
    %s180 = sphi 0, %s178
    %s181 = sphi 0, %s180
    %s195 = sphi 0, %s181
    %s199 = sphi 0, %s199
    %s201 = sphi 0, %s199
    %s202 = sphi 0, %s201
    %s216 = sphi 0, %s202
    %s220 = sphi 0, %s220
    %s222 = sphi 0, %s220
    %s223 = sphi 0, %s222
    %s237 = sphi 0, %s223
    %s243 = sphi 0, %s245
    %s246 = sphi 0, %s243
    %s247 = sphi 0, %s246
    %s263 = sphi 0, %s247
    %s269 = sphi 0, %s271
    %s272 = sphi 0, %s269
    %s273 = sphi 0, %s272
    %s289 = sphi 0, %s273
  $region4: #{arblock_forward.1} parent=0 // loop_header_branch
    %21 = sbr.rel (%p19) target = $region8
  $region5: #{arblock_forward.1} parent=0 // loop_body
    %s23 = ssub.s32 %s18, 1
    %s24 = ssub.s32 %s18, 2
    %s25 = sadd.s32 %s18, 1
    %s26 = ssub.s32 %s18, %s25
    %p27 = scmp.eq.s32.totalorder %s26, 0
    %s29 = sadd.s32 %s28, 1
    %s30 = scalar_select %p27, %s28, %s29
    %p33 = pneg %p27
    %p34 = scmp.eq.s32.totalorder %s18, 1
    %p35 = por %p33, %p34
    %p36 = scmp.ne.s32.totalorder %s28, %s31
    %p37 = scmp.eq.s32.totalorder %s18, 0
    %p38 = por %p36, %p37
    %p39 = scmp.ne.s32.totalorder %s28, %s31
    %p40 = scmp.eq.s32.totalorder %s23, 1
    %p41 = por %p39, %p40
    %p42 = scmp.ne.s32.totalorder %s31, %s32
    %p43 = scmp.eq.s32.totalorder %s23, 0
    %p44 = por %p42, %p43
    %p45 = scmp.ne.s32.totalorder %s31, %s32
    %p46 = scmp.eq.s32.totalorder %s24, 1
    %p47 = por %p45, %p46
    %p49 = scmp.ne.s32.totalorder %s32, %s48
    %p50 = scmp.eq.s32.totalorder %s24, 0
    %p51 = por %p49, %p50
    %s53 = sadd.s32 %s52, 1
    %p56 = scmp.eq.s32.totalorder %s18, 1
    %p57 = scmp.ne.s32.totalorder %s52, %s54
    %p58 = scmp.eq.s32.totalorder %s18, 0
    %p59 = por %p57, %p58
    %p60 = scmp.ne.s32.totalorder %s52, %s54
    %p61 = scmp.eq.s32.totalorder %s23, 1
    %p62 = por %p60, %p61
    %p63 = scmp.ne.s32.totalorder %s54, %s55
    %p64 = scmp.eq.s32.totalorder %s23, 0
    %p65 = por %p63, %p64
    %p66 = scmp.ne.s32.totalorder %s54, %s55
    %p67 = scmp.eq.s32.totalorder %s24, 1
    %p68 = por %p66, %p67
    %p70 = scmp.ne.s32.totalorder %s55, %s69
    %p71 = scmp.eq.s32.totalorder %s24, 0
    %p72 = por %p70, %p71
    %s74 = sadd.s32 %s73, 1
    %p77 = scmp.eq.s32.totalorder %s18, 1
    %p78 = scmp.ne.s32.totalorder %s73, %s75
    %p79 = scmp.eq.s32.totalorder %s18, 0
    %p80 = por %p78, %p79
    %p81 = scmp.ne.s32.totalorder %s73, %s75
    %p82 = scmp.eq.s32.totalorder %s23, 1
    %p83 = por %p81, %p82
    %p84 = scmp.ne.s32.totalorder %s75, %s76
    %p85 = scmp.eq.s32.totalorder %s23, 0
    %p86 = por %p84, %p85
    %p87 = scmp.ne.s32.totalorder %s75, %s76
    %p88 = scmp.eq.s32.totalorder %s24, 1
    %p89 = por %p87, %p88
    %p91 = scmp.ne.s32.totalorder %s76, %s90
    %p92 = scmp.eq.s32.totalorder %s24, 0
    %p93 = por %p91, %p92
    %s95 = sadd.s32 %s94, 1
    %p98 = scmp.eq.s32.totalorder %s18, 1
    %p99 = scmp.ne.s32.totalorder %s94, %s96
    %p100 = scmp.eq.s32.totalorder %s18, 0
    %p101 = por %p99, %p100
    %p102 = scmp.ne.s32.totalorder %s94, %s96
    %p103 = scmp.eq.s32.totalorder %s23, 1
    %p104 = por %p102, %p103
    %p105 = scmp.ne.s32.totalorder %s96, %s97
    %p106 = scmp.eq.s32.totalorder %s23, 0
    %p107 = por %p105, %p106
    %p108 = scmp.ne.s32.totalorder %s96, %s97
    %p109 = scmp.eq.s32.totalorder %s24, 1
    %p110 = por %p108, %p109
    %p112 = scmp.ne.s32.totalorder %s97, %s111
    %p113 = scmp.eq.s32.totalorder %s24, 0
    %p114 = por %p112, %p113
    %s116 = sadd.s32 %s115, 1
    %p119 = scmp.eq.s32.totalorder %s18, 1
    %p120 = scmp.ne.s32.totalorder %s115, %s117
    %p121 = scmp.eq.s32.totalorder %s18, 0
    %p122 = por %p120, %p121
    %p123 = scmp.ne.s32.totalorder %s115, %s117
    %p124 = scmp.eq.s32.totalorder %s23, 1
    %p125 = por %p123, %p124
    %p126 = scmp.ne.s32.totalorder %s117, %s118
    %p127 = scmp.eq.s32.totalorder %s23, 0
    %p128 = por %p126, %p127
    %p129 = scmp.ne.s32.totalorder %s117, %s118
    %p130 = scmp.eq.s32.totalorder %s24, 1
    %p131 = por %p129, %p130
    %p133 = scmp.ne.s32.totalorder %s118, %s132
    %p134 = scmp.eq.s32.totalorder %s24, 0
    %p135 = por %p133, %p134
    %s137 = sadd.s32 %s136, 1
    %p140 = scmp.eq.s32.totalorder %s18, 1
    %p141 = scmp.ne.s32.totalorder %s136, %s138
    %p142 = scmp.eq.s32.totalorder %s18, 0
    %p143 = por %p141, %p142
    %p144 = scmp.ne.s32.totalorder %s136, %s138
    %p145 = scmp.eq.s32.totalorder %s23, 1
    %p146 = por %p144, %p145
    %p147 = scmp.ne.s32.totalorder %s138, %s139
    %p148 = scmp.eq.s32.totalorder %s23, 0
    %p149 = por %p147, %p148
    %p150 = scmp.ne.s32.totalorder %s138, %s139
    %p151 = scmp.eq.s32.totalorder %s24, 1
    %p152 = por %p150, %p151
    %p154 = scmp.ne.s32.totalorder %s139, %s153
    %p155 = scmp.eq.s32.totalorder %s24, 0
    %p156 = por %p154, %p155
    %s158 = sadd.s32 %s157, 1
    %p161 = scmp.eq.s32.totalorder %s18, 1
    %p162 = scmp.ne.s32.totalorder %s157, %s159
    %p163 = scmp.eq.s32.totalorder %s18, 0
    %p164 = por %p162, %p163
    %p165 = scmp.ne.s32.totalorder %s157, %s159
    %p166 = scmp.eq.s32.totalorder %s23, 1
    %p167 = por %p165, %p166
    %p168 = scmp.ne.s32.totalorder %s159, %s160
    %p169 = scmp.eq.s32.totalorder %s23, 0
    %p170 = por %p168, %p169
    %p171 = scmp.ne.s32.totalorder %s159, %s160
    %p172 = scmp.eq.s32.totalorder %s24, 1
    %p173 = por %p171, %p172
    %p175 = scmp.ne.s32.totalorder %s160, %s174
    %p176 = scmp.eq.s32.totalorder %s24, 0
    %p177 = por %p175, %p176
    %s179 = sadd.s32 %s178, 1
    %p182 = scmp.eq.s32.totalorder %s18, 1
    %p183 = scmp.ne.s32.totalorder %s178, %s180
    %p184 = scmp.eq.s32.totalorder %s18, 0
    %p185 = por %p183, %p184
    %p186 = scmp.ne.s32.totalorder %s178, %s180
    %p187 = scmp.eq.s32.totalorder %s23, 1
    %p188 = por %p186, %p187
    %p189 = scmp.ne.s32.totalorder %s180, %s181
    %p190 = scmp.eq.s32.totalorder %s23, 0
    %p191 = por %p189, %p190
    %p192 = scmp.ne.s32.totalorder %s180, %s181
    %p193 = scmp.eq.s32.totalorder %s24, 1
    %p194 = por %p192, %p193
    %p196 = scmp.ne.s32.totalorder %s181, %s195
    %p197 = scmp.eq.s32.totalorder %s24, 0
    %p198 = por %p196, %p197
    %s200 = sadd.s32 %s199, 1
    %p203 = scmp.eq.s32.totalorder %s18, 1
    %p204 = scmp.ne.s32.totalorder %s199, %s201
    %p205 = scmp.eq.s32.totalorder %s18, 0
    %p206 = por %p204, %p205
    %p207 = scmp.ne.s32.totalorder %s199, %s201
    %p208 = scmp.eq.s32.totalorder %s23, 1
    %p209 = por %p207, %p208
    %p210 = scmp.ne.s32.totalorder %s201, %s202
    %p211 = scmp.eq.s32.totalorder %s23, 0
    %p212 = por %p210, %p211
    %p213 = scmp.ne.s32.totalorder %s201, %s202
    %p214 = scmp.eq.s32.totalorder %s24, 1
    %p215 = por %p213, %p214
    %p217 = scmp.ne.s32.totalorder %s202, %s216
    %p218 = scmp.eq.s32.totalorder %s24, 0
    %p219 = por %p217, %p218
    %s221 = sadd.s32 %s220, 1
    %p224 = scmp.eq.s32.totalorder %s18, 1
    %p225 = scmp.ne.s32.totalorder %s220, %s222
    %p226 = scmp.eq.s32.totalorder %s18, 0
    %p227 = por %p225, %p226
    %p228 = scmp.ne.s32.totalorder %s220, %s222
    %p229 = scmp.eq.s32.totalorder %s23, 1
    %p230 = por %p228, %p229
    %p231 = scmp.ne.s32.totalorder %s222, %s223
    %p232 = scmp.eq.s32.totalorder %s23, 0
    %p233 = por %p231, %p232
    %p234 = scmp.ne.s32.totalorder %s222, %s223
    %p235 = scmp.eq.s32.totalorder %s24, 1
    %p236 = por %p234, %p235
    %p238 = scmp.ne.s32.totalorder %s223, %s237
    %p239 = scmp.eq.s32.totalorder %s24, 0
    %p240 = por %p238, %p239
    %s241 = ssub.s32 %s18, %s25
    %p242 = scmp.eq.s32.totalorder %s241, 0
    %s244 = sadd.s32 %s243, 1
    %s245 = scalar_select %p242, %s243, %s244
    %p248 = pneg %p242
    %p249 = scmp.eq.s32.totalorder %s18, 1
    %p250 = por %p248, %p249
    %p251 = scmp.ne.s32.totalorder %s243, %s246
    %p252 = scmp.eq.s32.totalorder %s18, 0
    %p253 = por %p251, %p252
    %p254 = scmp.ne.s32.totalorder %s243, %s246
    %p255 = scmp.eq.s32.totalorder %s23, 1
    %p256 = por %p254, %p255
    %p257 = scmp.ne.s32.totalorder %s246, %s247
    %p258 = scmp.eq.s32.totalorder %s23, 0
    %p259 = por %p257, %p258
    %p260 = scmp.ne.s32.totalorder %s246, %s247
    %p261 = scmp.eq.s32.totalorder %s24, 1
    %p262 = por %p260, %p261
    %p264 = scmp.ne.s32.totalorder %s247, %s263
    %p265 = scmp.eq.s32.totalorder %s24, 0
    %p266 = por %p264, %p265
    %s267 = ssub.s32 %s18, %s25
    %p268 = scmp.eq.s32.totalorder %s267, 0
    %s270 = sadd.s32 %s269, 1
    %s271 = scalar_select %p268, %s269, %s270
    %p274 = pneg %p268
    %p275 = scmp.eq.s32.totalorder %s18, 1
    %p276 = por %p274, %p275
    %p277 = scmp.ne.s32.totalorder %s269, %s272
    %p278 = scmp.eq.s32.totalorder %s18, 0
    %p279 = por %p277, %p278
    %p280 = scmp.ne.s32.totalorder %s269, %s272
    %p281 = scmp.eq.s32.totalorder %s23, 1
    %p282 = por %p280, %p281
    %p283 = scmp.ne.s32.totalorder %s272, %s273
    %p284 = scmp.eq.s32.totalorder %s23, 0
    %p285 = por %p283, %p284
    %p286 = scmp.ne.s32.totalorder %s272, %s273
    %p287 = scmp.eq.s32.totalorder %s24, 1
    %p288 = por %p286, %p287
    %p290 = scmp.ne.s32.totalorder %s273, %s289
    %p291 = scmp.eq.s32.totalorder %s24, 0
    %p292 = por %p290, %p291
    %p293 = scmp.le.s32.totalorder 1, %s18
    %p294 = scmp.lt.s32.totalorder %s18, 3
    %p295 = pnand %p293, %p294
    %p296 = pneg %p295
    // Predicated region
    $region9: #{arblock_forward.1} parent=5 // pred_check
      _
    $region10: #{arblock_forward.1} parent=5 // pred_check_branch
      %298 = sbr.rel (%p295) target = $region12
    $region11: #{arblock_forward.1} parent=5 // pred_region
      %s299 = ssub.s32 %s18, 1
      // Predicated region
      $region13: #{arblock_forward.1} parent=11 // pred_check
        %p300 = pneg %p65
      $region14: #{arblock_forward.1} parent=11 // pred_check_branch
        %302 = sbr.rel (%p300) target = $region16
      $region15: #{arblock_forward.1} parent=11 // pred_region
        _
      $region16: #{arblock_forward.1} parent=11 // pred_fallthru
        _
      // Predicated region
      $region17: #{arblock_forward.1} parent=11 // pred_check
        %p303 = pneg %p86
      $region18: #{arblock_forward.1} parent=11 // pred_check_branch
        %305 = sbr.rel (%p303) target = $region20
      $region19: #{arblock_forward.1} parent=11 // pred_region
        _
      $region20: #{arblock_forward.1} parent=11 // pred_fallthru
        _
      // Predicated region
      $region21: #{arblock_forward.1} parent=11 // pred_check
        %p306 = pneg %p107
      $region22: #{arblock_forward.1} parent=11 // pred_check_branch
        %308 = sbr.rel (%p306) target = $region24
      $region23: #{arblock_forward.1} parent=11 // pred_region
        _
      $region24: #{arblock_forward.1} parent=11 // pred_fallthru
        _
      // Predicated region
      $region25: #{arblock_forward.1} parent=11 // pred_check
        %p309 = pneg %p128
      $region26: #{arblock_forward.1} parent=11 // pred_check_branch
        %311 = sbr.rel (%p309) target = $region28
      $region27: #{arblock_forward.1} parent=11 // pred_region
        _
      $region28: #{arblock_forward.1} parent=11 // pred_fallthru
        _
      // Predicated region
      $region29: #{arblock_forward.1} parent=11 // pred_check
        %p312 = pneg %p149
      $region30: #{arblock_forward.1} parent=11 // pred_check_branch
        %314 = sbr.rel (%p312) target = $region32
      $region31: #{arblock_forward.1} parent=11 // pred_region
        _
      $region32: #{arblock_forward.1} parent=11 // pred_fallthru
        _
      // Predicated region
      $region33: #{arblock_forward.1} parent=11 // pred_check
        %p315 = pneg %p170
      $region34: #{arblock_forward.1} parent=11 // pred_check_branch
        %317 = sbr.rel (%p315) target = $region36
      $region35: #{arblock_forward.1} parent=11 // pred_region
        _
      $region36: #{arblock_forward.1} parent=11 // pred_fallthru
        _
      // Predicated region
      $region37: #{arblock_forward.1} parent=11 // pred_check
        %p318 = pneg %p191
      $region38: #{arblock_forward.1} parent=11 // pred_check_branch
        %320 = sbr.rel (%p318) target = $region40
      $region39: #{arblock_forward.1} parent=11 // pred_region
        _
      $region40: #{arblock_forward.1} parent=11 // pred_fallthru
        _
      // Predicated region
      $region41: #{arblock_forward.1} parent=11 // pred_check
        %p321 = pneg %p212
      $region42: #{arblock_forward.1} parent=11 // pred_check_branch
        %323 = sbr.rel (%p321) target = $region44
      $region43: #{arblock_forward.1} parent=11 // pred_region
        _
      $region44: #{arblock_forward.1} parent=11 // pred_fallthru
        _
      // Predicated region
      $region45: #{arblock_forward.1} parent=11 // pred_check
        %p324 = pneg %p233
      $region46: #{arblock_forward.1} parent=11 // pred_check_branch
        %326 = sbr.rel (%p324) target = $region48
      $region47: #{arblock_forward.1} parent=11 // pred_region
        _
      $region48: #{arblock_forward.1} parent=11 // pred_fallthru
        _
    $region12: #{arblock_forward.1} parent=5 // pred_fallthru
      _
    %p327 = scmp.lt.s32.totalorder %s18, 2
    // Predicated region
    $region49: #{arblock_forward.1} parent=5 // pred_check
      %p328 = pneg %p327
    $region50: #{arblock_forward.1} parent=5 // pred_check_branch
      %330 = sbr.rel (%p328) target = $region52
    $region51: #{arblock_forward.1} parent=5 // pred_region
      // Predicated region
      $region53: #{arblock_forward.1} parent=51 // pred_check
        %p331 = pneg %p38
      $region54: #{arblock_forward.1} parent=51 // pred_check_branch
        %333 = sbr.rel (%p331) target = $region56
      $region55: #{arblock_forward.1} parent=51 // pred_region
        %p334 = scmp.lt.s32.totalorder %s18, 1
        %s335 = scalar_select %p334, %s18, 1
        %s336 = smul.addr %s335, 2
        %s337 = smul.addr %s336, 8
        %s338 = scalar_lea.vmem %s0, %s337
      $region56: #{arblock_forward.1} parent=51 // pred_fallthru
        _
    $region52: #{arblock_forward.1} parent=5 // pred_fallthru
      _
    %p339 = scmp.le.s32.totalorder 1, %s18
    %p340 = scmp.lt.s32.totalorder %s18, 3
    %p341 = pnand %p339, %p340
    %p342 = pneg %p341
    // Predicated region
    $region57: #{arblock_forward.1} parent=5 // pred_check
      _
    $region58: #{arblock_forward.1} parent=5 // pred_check_branch
      %344 = sbr.rel (%p341) target = $region60
    $region59: #{arblock_forward.1} parent=5 // pred_region
      %s345 = ssub.s32 %s18, 1
      %p346 = scmp.lt.s32.totalorder %s23, 1
      %s347 = scalar_select %p346, %s23, 1
      %s348 = smul.addr %s347, 2
      %s349 = smul.addr %s348, 8
      %s350 = scalar_lea.vmem %s0, %s349
      %p351 = pneg %p44
      %p352 = pneg %p41
      %p353 = pneg %p65
      %p354 = pneg %p62
      %p355 = pneg %p86
      %p356 = pneg %p83
      %p357 = pneg %p107
      %p358 = pneg %p104
      %p359 = pneg %p128
      %p360 = pneg %p125
      %p361 = pneg %p149
      %p362 = pneg %p146
      %p363 = pneg %p170
      %p364 = pneg %p167
      %p365 = pneg %p191
      %p366 = pneg %p188
      %p367 = pneg %p212
      %p368 = pneg %p209
      %p369 = pneg %p233
      %p370 = pneg %p230
      %p371 = pneg %p259
      %p372 = pneg %p256
      %p373 = scmp.lt.s32.totalorder %s23, 1
      %s374 = scalar_select %p373, %s23, 1
      %s375 = smul.addr %s374, 2
      %s376 = smul.addr %s375, 8
      %s377 = scalar_lea.vmem %s10, %s376
      %p378 = pneg %p285
      %p379 = pneg %p282
      %p380 = scmp.lt.s32.totalorder %s23, 1
      %s381 = scalar_select %p380, %s23, 1
      %s382 = smul.addr %s381, 2
      %s383 = smul.addr %s382, 8
      %s384 = scalar_lea.vmem %s11, %s383
      %p385 = scmp.lt.s32.totalorder %s23, 1
      %s386 = scalar_select %p385, %s23, 1
      %s387 = smul.addr %s386, 2
      %s388 = smul.addr %s387, 8
      %s389 = scalar_lea.vmem %s0, %s388
      %p390 = scmp.lt.s32.totalorder %s23, 1
      %s391 = scalar_select %p390, %s23, 1
      %s392 = smul.addr %s391, 2
      %s393 = smul.addr %s392, 8
      %s394 = scalar_lea.vmem %s10, %s393
      %p395 = scmp.lt.s32.totalorder %s23, 1
      %s396 = scalar_select %p395, %s23, 1
      %s397 = smul.addr %s396, 2
      %s398 = smul.addr %s397, 8
      %s399 = scalar_lea.vmem %s11, %s398
      %v401 = vld [vmem:[%s389] sm:$0xff]
      %v402 = vld [vmem:[%s389 + $0x8] sm:$0xff]
      %v403 = vmul.f32 %v401, 255.0
      %v404 = vmul.f32 %v402, 255.0
      %v405 = vld [vmem:[%s1] sm:$0xff]
      %v406 = vlaneseq
      %v407 = vand.u32 %v406, 127
      %v408 = vadd.s32 %v407, 128
      %vm409 = vcmp.lt.s32.totalorder %v407, 0
      %v410 = vsub.s32 0, %v407
      %v411 = vsel %vm409, %v410, %v407
      %v412 = vshrl.u32 %v411, 4
      %v413 = vand.u32 %v411, 15
      %v414 = vsub.s32 0, %v413
      %v415 = vsel %vm409, %v414, %v413
      %vm416 = vcmp.lt.s32.totalorder %v408, 0
      %v417 = vsub.s32 0, %v408
      %v418 = vsel %vm416, %v417, %v408
      %v419 = vshrl.u32 %v418, 4
      %v420 = vand.u32 %v418, 15
      %v421 = vsub.s32 0, %v420
      %v422 = vsel %vm416, %v421, %v420
      %vm423 = vcmp.ne.s32.totalorder %v415, 0
      %vm424 = vcmp.ne.s32.totalorder %v422, 0
      %vm425 = vcmp.lt.s32.totalorder %v415, 0
      %vm426 = vcmp.lt.s32.totalorder %v422, 0
      %vm427 = vmand %vm425, %vm423
      %vm428 = vmand %vm426, %vm424
      %v429 = vadd.s32 %v415, 16
      %v430 = vadd.s32 %v422, 16
      %v431 = vsel %vm427, %v429, %v415
      %v432 = vsel %vm428, %v430, %v422
      %434 = vrot.lane.b32.xlu0 %v403, 96
      %v435 = vpop.permute.xlu0 %434
      %438 = vrot.lane.b32.xlu0 %v403, 32
      %v439 = vpop.permute.xlu0 %438
      %440 = vrot.lane.b32.xlu0 %v404, 32
      %v441 = vpop.permute.xlu0 %440
      %vm442 = vcmask 261120
      %v443 = vsel %vm442, %v439, %v441
      %447 = vrot.lane.b32.xlu0 %v404, 64
      %v448 = vpop.permute.xlu0 %447
      %450 = vrot.lane.b32.xlu0 %v404, 96
      %v451 = vpop.permute.xlu0 %450
      %vm453 = vcmask 130048
      %v454 = vsel %vm453, %v435, %v403
      %v455 = vsel %vm442, %v454, %v439
      %v456 = vsel %vm442, %v441, %v448
      %vm457 = vcmask 392192
      %v458 = vsel %vm457, %v456, %v451
      %460 = vset.pattern.permute.xlu0 0
      %461 = vperm.xlu0 %460, %v405
      %v462 = vpop.permute.xlu0 %461
      %v464 = vmul.f32 %v462, %v455
      %v465 = vmul.f32 %v462, %v443
      %v466 = vadd.f32 %v464, 0.0
      %v467 = vadd.f32 %v465, 0.0
      %468 = vset.pattern.permute.xlu0 1
      %469 = vperm.xlu0 %468, %v405
      %v470 = vpop.permute.xlu0 %469
      %v472 = vmul.f32 %v470, %v455
      %v473 = vmul.f32 %v470, %v443
      %v474 = vmul.f32 %v470, %v458
      %478 = vrot.lane.b32.xlu0 %v472, 112
      %v479 = vpop.permute.xlu0 %478
      %480 = vrot.lane.b32.xlu0 %v473, 112
      %v481 = vpop.permute.xlu0 %480
      %482 = vrot.lane.b32.xlu0 %v474, 112
      %v483 = vpop.permute.xlu0 %482
      %vm484 = vcmask 916480
      %v485 = vsel %vm484, %v479, %v481
      %v486 = vsel %vm484, %v481, %v483
      %v489 = vadd.f32 %v466, %v485
      %v490 = vadd.f32 %v467, %v486
      %491 = vset.pattern.permute.xlu0 2
      %492 = vperm.xlu0 %491, %v405
      %v493 = vpop.permute.xlu0 %492
      %v495 = vmul.f32 %v493, %v455
      %v496 = vmul.f32 %v493, %v443
      %v497 = vmul.f32 %v493, %v458
      %501 = vrot.lane.b32.xlu0 %v495, 96
      %v502 = vpop.permute.xlu0 %501
      %503 = vrot.lane.b32.xlu0 %v496, 96
      %v504 = vpop.permute.xlu0 %503
      %505 = vrot.lane.b32.xlu0 %v497, 96
      %v506 = vpop.permute.xlu0 %505
      %vm507 = vcmask 785408
      %v508 = vsel %vm507, %v502, %v504
      %v509 = vsel %vm507, %v504, %v506
      %v512 = vadd.f32 %v489, %v508
      %v513 = vadd.f32 %v490, %v509
      %514 = vset.pattern.permute.xlu0 3
      %515 = vperm.xlu0 %514, %v405
      %v516 = vpop.permute.xlu0 %515
      %v518 = vmul.f32 %v516, %v455
      %v519 = vmul.f32 %v516, %v443
      %v520 = vmul.f32 %v516, %v458
      %524 = vrot.lane.b32.xlu0 %v518, 80
      %v525 = vpop.permute.xlu0 %524
      %526 = vrot.lane.b32.xlu0 %v519, 80
      %v527 = vpop.permute.xlu0 %526
      %528 = vrot.lane.b32.xlu0 %v520, 80
      %v529 = vpop.permute.xlu0 %528
      %vm530 = vcmask 654336
      %v531 = vsel %vm530, %v525, %v527
      %v532 = vsel %vm530, %v527, %v529
      %v535 = vadd.f32 %v512, %v531
      %v536 = vadd.f32 %v513, %v532
      %537 = vset.pattern.permute.xlu0 4
      %538 = vperm.xlu0 %537, %v405
      %v539 = vpop.permute.xlu0 %538
      %v541 = vmul.f32 %v539, %v455
      %v542 = vmul.f32 %v539, %v443
      %v543 = vmul.f32 %v539, %v458
      %547 = vrot.lane.b32.xlu0 %v541, 64
      %v548 = vpop.permute.xlu0 %547
      %549 = vrot.lane.b32.xlu0 %v542, 64
      %v550 = vpop.permute.xlu0 %549
      %551 = vrot.lane.b32.xlu0 %v543, 64
      %v552 = vpop.permute.xlu0 %551
      %vm553 = vcmask 523264
      %v554 = vsel %vm553, %v548, %v550
      %v555 = vsel %vm553, %v550, %v552
      %v558 = vadd.f32 %v535, %v554
      %v559 = vadd.f32 %v536, %v555
      %560 = vrot.lane.b32.xlu0 %v558, 2
      %v561 = vpop.permute.xlu0 %560
      %562 = vrot.lane.b32.xlu0 %v559, 2
      %v563 = vpop.permute.xlu0 %562
      %vm564 = vcmp.lt.s32.totalorder %v407, 2
      %v565 = vsel %vm564, %v561, %v563
      %v566 = vsel %vm564, %v563, %v561
      %567 = vrot.lane.b32.xlu0 %v558, 1
      %v568 = vpop.permute.xlu0 %567
      %569 = vrot.lane.b32.xlu0 %v559, 1
      %v570 = vpop.permute.xlu0 %569
      %vm571 = vcmp.lt.s32.totalorder %v407, 1
      %v572 = vsel %vm571, %v568, %v570
      %v573 = vsel %vm571, %v570, %v568
      %574 = vrot.lane.b32.xlu0 %v558, 127
      %v575 = vpop.permute.xlu0 %574
      %576 = vrot.lane.b32.xlu0 %v559, 127
      %v577 = vpop.permute.xlu0 %576
      %vm578 = vcmp.lt.s32.totalorder %v407, 127
      %v579 = vsel %vm578, %v575, %v577
      %v580 = vsel %vm578, %v577, %v575
      %581 = vrot.lane.b32.xlu0 %v558, 126
      %v582 = vpop.permute.xlu0 %581
      %583 = vrot.lane.b32.xlu0 %v559, 126
      %v584 = vpop.permute.xlu0 %583
      %vm585 = vcmp.lt.s32.totalorder %v407, 126
      %v586 = vsel %vm585, %v582, %v584
      %v587 = vsel %vm585, %v584, %v582
      %vm588 = vcmp.ge.s32.totalorder %v431, 2
      %vm589 = vcmp.ge.s32.totalorder %v432, 2
      %v590 = vsel %vm588, 1, 0
      %v591 = vsel %vm589, 1, 0
      %vm592 = vcmp.eq.s32.totalorder %v590, 1
      %vm593 = vcmp.eq.s32.totalorder %v591, 1
      %v594 = vsel %vm592, %v566, 0.0
      %v595 = vsel %vm593, %v565, 0.0
      %v596 = vmul.f32 %v462, %v594
      %v597 = vmul.f32 %v462, %v595
      %v598 = vadd.f32 %v596, 0.0
      %v599 = vadd.f32 %v597, 0.0
      %vm600 = vcmp.ge.s32.totalorder %v431, 1
      %vm601 = vcmp.ge.s32.totalorder %v432, 1
      %v602 = vsel %vm600, 1, 0
      %v603 = vsel %vm601, 1, 0
      %vm604 = vcmp.eq.s32.totalorder %v602, 1
      %vm605 = vcmp.eq.s32.totalorder %v603, 1
      %v606 = vsel %vm604, %v573, 0.0
      %v607 = vsel %vm605, %v572, 0.0
      %v608 = vmul.f32 %v470, %v606
      %v609 = vmul.f32 %v470, %v607
      %v610 = vadd.f32 %v598, %v608
      %v611 = vadd.f32 %v599, %v609
      %v612 = vmul.f32 %v493, %v558
      %v613 = vmul.f32 %v493, %v559
      %v614 = vadd.f32 %v610, %v612
      %v615 = vadd.f32 %v611, %v613
      %vm616 = vcmp.lt.s32.totalorder %v431, 15
      %vm617 = vcmp.lt.s32.totalorder %v432, 15
      %v618 = vsel %vm616, 1, 0
      %v619 = vsel %vm617, 1, 0
      %vm620 = vcmp.eq.s32.totalorder %v618, 1
      %vm621 = vcmp.eq.s32.totalorder %v619, 1
      %v622 = vsel %vm620, %v579, 0.0
      %v623 = vsel %vm621, %v580, 0.0
      %v624 = vmul.f32 %v516, %v622
      %v625 = vmul.f32 %v516, %v623
      %v626 = vadd.f32 %v614, %v624
      %v627 = vadd.f32 %v615, %v625
      %vm628 = vcmp.lt.s32.totalorder %v431, 14
      %vm629 = vcmp.lt.s32.totalorder %v432, 14
      %v630 = vsel %vm628, 1, 0
      %v631 = vsel %vm629, 1, 0
      %vm632 = vcmp.eq.s32.totalorder %v630, 1
      %vm633 = vcmp.eq.s32.totalorder %v631, 1
      %v634 = vsel %vm632, %v586, 0.0
      %v635 = vsel %vm633, %v587, 0.0
      %v636 = vmul.f32 %v539, %v634
      %v637 = vmul.f32 %v539, %v635
      %v638 = vadd.f32 %v626, %v636
      %v639 = vadd.f32 %v627, %v637
      %vm640 = vcmp.eq.s32.totalorder %v431, 0
      %vm641 = vcmp.eq.s32.totalorder %v432, 0
      %v642 = vsel %vm640, 1, 0
      %v643 = vsel %vm641, 1, 0
      %vm644 = vcmp.eq.s32.totalorder %v642, 1
      %vm645 = vcmp.eq.s32.totalorder %v643, 1
      %v646 = vsel %vm644, %v586, 0.0
      %v647 = vsel %vm645, %v587, 0.0
      %v648 = vmul.f32 %v462, %v646
      %v649 = vmul.f32 %v462, %v647
      %v650 = vadd.f32 %v638, %v648
      %v651 = vadd.f32 %v639, %v649
      %vm652 = vcmp.eq.s32.totalorder %v431, 1
      %vm653 = vcmp.eq.s32.totalorder %v432, 1
      %v654 = vsel %vm652, 1, 0
      %v655 = vsel %vm653, 1, 0
      %vm656 = vcmp.eq.s32.totalorder %v654, 1
      %vm657 = vcmp.eq.s32.totalorder %v655, 1
      %v658 = vsel %vm656, %v558, 0.0
      %v659 = vsel %vm657, %v559, 0.0
      %v660 = vmul.f32 %v462, %v658
      %v661 = vmul.f32 %v462, %v659
      %v662 = vadd.f32 %v650, %v660
      %v663 = vadd.f32 %v651, %v661
      %v664 = vsel %vm644, %v579, 0.0
      %v665 = vsel %vm645, %v580, 0.0
      %v666 = vmul.f32 %v470, %v664
      %v667 = vmul.f32 %v470, %v665
      %v668 = vadd.f32 %v662, %v666
      %v669 = vadd.f32 %v663, %v667
      %vm670 = vcmp.eq.s32.totalorder %v431, 15
      %vm671 = vcmp.eq.s32.totalorder %v432, 15
      %v672 = vsel %vm670, 1, 0
      %v673 = vsel %vm671, 1, 0
      %vm674 = vcmp.eq.s32.totalorder %v672, 1
      %vm675 = vcmp.eq.s32.totalorder %v673, 1
      %v676 = vsel %vm674, %v573, 0.0
      %v677 = vsel %vm675, %v572, 0.0
      %v678 = vmul.f32 %v516, %v676
      %v679 = vmul.f32 %v516, %v677
      %v680 = vadd.f32 %v668, %v678
      %v681 = vadd.f32 %v669, %v679
      %vm682 = vcmp.eq.s32.totalorder %v431, 14
      %vm683 = vcmp.eq.s32.totalorder %v432, 14
      %v684 = vsel %vm682, 1, 0
      %v685 = vsel %vm683, 1, 0
      %vm686 = vcmp.eq.s32.totalorder %v684, 1
      %vm687 = vcmp.eq.s32.totalorder %v685, 1
      %v688 = vsel %vm686, %v558, 0.0
      %v689 = vsel %vm687, %v559, 0.0
      %v690 = vmul.f32 %v539, %v688
      %v691 = vmul.f32 %v539, %v689
      %v692 = vadd.f32 %v680, %v690
      %v693 = vadd.f32 %v681, %v691
      %v694 = vsel %vm674, %v566, 0.0
      %v695 = vsel %vm675, %v565, 0.0
      %v696 = vmul.f32 %v539, %v694
      %v697 = vmul.f32 %v539, %v695
      %v698 = vadd.f32 %v692, %v696
      %v699 = vadd.f32 %v693, %v697
      %v700 = vadd.f32 %v698, 1.0
      %v701 = vadd.f32 %v699, 1.0
      %v702 = vlog2.pop %v700
      %v703 = vmul.f32 %v702, 0.6931472
      %v704 = vlog2.pop %v701
      %v705 = vmul.f32 %v704, 0.6931472
      %v706 = vadd.f32 %v403, 1.0
      %v707 = vadd.f32 %v404, 1.0
      %v708 = vlog2.pop %v706
      %v709 = vmul.f32 %v708, 0.6931472
      %v710 = vlog2.pop %v707
      %v711 = vmul.f32 %v710, 0.6931472
      %v712 = vsub.f32 %v709, %v703
      %v713 = vsub.f32 %v711, %v705
      %714 = vst [vmem:[%s399] sm:$0xff] %v703
      %715 = vst [vmem:[%s399 + $0x8] sm:$0xff] %v705
      %v716 = vld [vmem:[%s2] sm:$0xf]
      %717 = vrot.lane.b32.xlu0 %v712, 34
      %v718 = vpop.permute.xlu0 %717
      %719 = vrot.lane.b32.xlu0 %v713, 34
      %v720 = vpop.permute.xlu0 %719
      %vm721 = vcmp.lt.s32.totalorder %v407, 34
      %v722 = vsel %vm721, %v718, %v720
      %v723 = vsel %vm721, %v720, %v718
      %vm724 = vcmp.ge.s32.totalorder %v407, 32
      %vm725 = vcmp.ge.s32.totalorder %v408, 32
      %v726 = vsel %vm724, 1, 0
      %v727 = vsel %vm725, 1, 0
      %vm728 = vcmp.eq.s32.totalorder %v726, 1
      %vm729 = vcmp.eq.s32.totalorder %v727, 1
      %v730 = vsel %vm728, %v723, 0.0
      %v731 = vsel %vm729, %v722, 0.0
      %v732 = vsel %vm592, %v730, 0.0
      %v733 = vsel %vm593, %v731, 0.0
      %734 = vrot.lane.b32.xlu0 %v712, 32
      %v735 = vpop.permute.xlu0 %734
      %736 = vrot.lane.b32.xlu0 %v713, 32
      %v737 = vpop.permute.xlu0 %736
      %vm738 = vcmp.lt.s32.totalorder %v407, 32
      %v739 = vsel %vm738, %v735, %v737
      %v740 = vsel %vm738, %v737, %v735
      %v741 = vsel %vm728, %v740, 0.0
      %v742 = vsel %vm729, %v739, 0.0
      %743 = vrot.lane.b32.xlu0 %v712, 30
      %v744 = vpop.permute.xlu0 %743
      %745 = vrot.lane.b32.xlu0 %v713, 30
      %v746 = vpop.permute.xlu0 %745
      %vm747 = vcmp.lt.s32.totalorder %v407, 30
      %v748 = vsel %vm747, %v744, %v746
      %v749 = vsel %vm747, %v746, %v744
      %v750 = vsel %vm728, %v749, 0.0
      %v751 = vsel %vm729, %v748, 0.0
      %v752 = vsel %vm632, %v750, 0.0
      %v753 = vsel %vm633, %v751, 0.0
      %754 = vrot.lane.b32.xlu0 %v712, 2
      %v755 = vpop.permute.xlu0 %754
      %756 = vrot.lane.b32.xlu0 %v713, 2
      %v757 = vpop.permute.xlu0 %756
      %v758 = vsel %vm564, %v755, %v757
      %v759 = vsel %vm564, %v757, %v755
      %v760 = vsel %vm592, %v759, 0.0
      %v761 = vsel %vm593, %v758, 0.0
      %762 = vrot.lane.b32.xlu0 %v712, 126
      %v763 = vpop.permute.xlu0 %762
      %764 = vrot.lane.b32.xlu0 %v713, 126
      %v765 = vpop.permute.xlu0 %764
      %v766 = vsel %vm585, %v763, %v765
      %v767 = vsel %vm585, %v765, %v763
      %v768 = vsel %vm632, %v766, 0.0
      %v769 = vsel %vm633, %v767, 0.0
      %770 = vrot.lane.b32.xlu0 %v712, 98
      %v771 = vpop.permute.xlu0 %770
      %772 = vrot.lane.b32.xlu0 %v713, 98
      %v773 = vpop.permute.xlu0 %772
      %vm774 = vcmp.lt.s32.totalorder %v407, 98
      %v775 = vsel %vm774, %v771, %v773
      %v776 = vsel %vm774, %v773, %v771
      %vm777 = vcmp.lt.s32.totalorder %v407, 224
      %vm778 = vcmp.lt.s32.totalorder %v408, 224
      %v779 = vsel %vm777, 1, 0
      %v780 = vsel %vm778, 1, 0
      %vm781 = vcmp.eq.s32.totalorder %v779, 1
      %vm782 = vcmp.eq.s32.totalorder %v780, 1
      %v783 = vsel %vm781, %v775, 0.0
      %v784 = vsel %vm782, %v776, 0.0
      %v785 = vsel %vm592, %v783, 0.0
      %v786 = vsel %vm593, %v784, 0.0
      %787 = vrot.lane.b32.xlu0 %v712, 96
      %v788 = vpop.permute.xlu0 %787
      %789 = vrot.lane.b32.xlu0 %v713, 96
      %v790 = vpop.permute.xlu0 %789
      %vm791 = vcmp.lt.s32.totalorder %v407, 96
      %v792 = vsel %vm791, %v788, %v790
      %v793 = vsel %vm791, %v790, %v788
      %v794 = vsel %vm781, %v792, 0.0
      %v795 = vsel %vm782, %v793, 0.0
      %796 = vrot.lane.b32.xlu0 %v712, 94
      %v797 = vpop.permute.xlu0 %796
      %798 = vrot.lane.b32.xlu0 %v713, 94
      %v799 = vpop.permute.xlu0 %798
      %vm800 = vcmp.lt.s32.totalorder %v407, 94
      %v801 = vsel %vm800, %v797, %v799
      %v802 = vsel %vm800, %v799, %v797
      %v803 = vsel %vm781, %v801, 0.0
      %v804 = vsel %vm782, %v802, 0.0
      %v805 = vsel %vm632, %v803, 0.0
      %v806 = vsel %vm633, %v804, 0.0
      %v807 = vpack.c.bf16 %v741, %v732
      %v808 = vpack.c.bf16 %v742, %v733
      %v809 = vpack.c.bf16 %v760, %v752
      %v810 = vpack.c.bf16 %v761, %v753
      %v811 = vpack.c.bf16 %v768, %v712
      %v812 = vpack.c.bf16 %v769, %v713
      %v813 = vpack.c.bf16 %v794, %v785
      %v814 = vpack.c.bf16 %v795, %v786
      %v815 = vpack.c.bf16 %v805, %v805
      %v816 = vpack.c.bf16 %v806, %v806
      %v817 = vld [vmem:[%s3] sm:$0xff]
      %819 = vset.pattern.permute.xlu0 0
      %820 = vperm.xlu0 %819, %v817
      %v821 = vpop.permute.xlu0 %820
      %vm823 = vcmask 588800
      %v825 = vsel %vm823, %v716, 0
      %vm827 = vcmask 1043456
      %v829 = vsel %vm827, %v815, 0
      %v832 = vsel %vm827, %v816, 0
      %834 = vmatprep.subr.bf16.mxu0 %v808
      %835 = vmatpush1.bf16.msra.mxu0 %v807
      %836 = vmatprep.subr.bf16.mxu0 %v810
      %837 = vmatpush1.bf16.msra.mxu0 %v809
      %838 = vmatprep.subr.bf16.mxu0 %v812
      %839 = vmatpush1.bf16.msra.mxu0 %v811
      %840 = vmatprep.subr.bf16.mxu0 %v814
      %841 = vmatpush1.bf16.msra.mxu0 %v813
      %842 = vmatprep.subr.bf16.mxu0 %v832
      %843 = vmatpush1.bf16.msra.mxu0 %v829
      %844 = vmatprep.subr.bf16.mxu0 0
      %845 = vmatpush1.bf16.msra.mxu0 0
      %846 = vmatprep.subr.bf16.mxu0 0
      %847 = vmatpush1.bf16.msra.mxu0 0
      %848 = vmatprep.subr.bf16.mxu0 0
      %849 = vmatpush1.bf16.msra.mxu0 0
      %850 = vmatprep.subr.bf16.mxu0 0
      %851 = vmatpush1.bf16.msra.mxu0 0
      %852 = vmatprep.subr.bf16.mxu0 0
      %853 = vmatpush1.bf16.msra.mxu0 0
      %854 = vmatprep.subr.bf16.mxu0 0
      %855 = vmatpush1.bf16.msra.mxu0 0
      %856 = vmatprep.subr.bf16.mxu0 0
      %857 = vmatpush1.bf16.msra.mxu0 0
      %858 = vmatprep.subr.bf16.mxu0 0
      %859 = vmatpush1.bf16.msra.mxu0 0
      %860 = vmatprep.subr.bf16.mxu0 0
      %861 = vmatpush1.bf16.msra.mxu0 0
      %862 = vmatprep.subr.bf16.mxu0 0
      %863 = vmatpush1.bf16.msra.mxu0 0
      %864 = vmatprep.subr.bf16.mxu0 0
      %865 = vmatpush1.bf16.msra.mxu0 0
      %866 = vmatprep.mubr.bf16.mxu0 0
      %867 = vmatmul.mubr.bf16.gmra.mrb[0].mxu0 %v825
      %v868 = vpop.f32.mrb[0].mxu0
      %v869 = vadd.f32 %v821, %v868
      %v870 = vpop.f32.mrb[0].mxu0
      %v871 = vadd.f32 %v821, %v870
      %v872 = vpop.f32.mrb[0].mxu0
      %v873 = vpop.f32.mrb[0].mxu0
      %874 = vdwg.mxu0
      %v875 = vmax.f32 %v869, 0.0
      %v876 = vmax.f32 %v871, 0.0
      %v877 = vld [vmem:[%s4] sm:$0xf]
      %878 = vrot.lane.b32.xlu0 %v875, 34
      %v879 = vpop.permute.xlu0 %878
      %880 = vrot.lane.b32.xlu0 %v876, 34
      %v881 = vpop.permute.xlu0 %880
      %v882 = vsel %vm721, %v879, %v881
      %v883 = vsel %vm721, %v881, %v879
      %v884 = vsel %vm728, %v883, 0.0
      %v885 = vsel %vm729, %v882, 0.0
      %v886 = vsel %vm592, %v884, 0.0
      %v887 = vsel %vm593, %v885, 0.0
      %888 = vrot.lane.b32.xlu0 %v875, 32
      %v889 = vpop.permute.xlu0 %888
      %890 = vrot.lane.b32.xlu0 %v876, 32
      %v891 = vpop.permute.xlu0 %890
      %v892 = vsel %vm738, %v889, %v891
      %v893 = vsel %vm738, %v891, %v889
      %v894 = vsel %vm728, %v893, 0.0
      %v895 = vsel %vm729, %v892, 0.0
      %896 = vrot.lane.b32.xlu0 %v875, 30
      %v897 = vpop.permute.xlu0 %896
      %898 = vrot.lane.b32.xlu0 %v876, 30
      %v899 = vpop.permute.xlu0 %898
      %v900 = vsel %vm747, %v897, %v899
      %v901 = vsel %vm747, %v899, %v897
      %v902 = vsel %vm728, %v901, 0.0
      %v903 = vsel %vm729, %v900, 0.0
      %v904 = vsel %vm632, %v902, 0.0
      %v905 = vsel %vm633, %v903, 0.0
      %906 = vrot.lane.b32.xlu0 %v875, 2
      %v907 = vpop.permute.xlu0 %906
      %908 = vrot.lane.b32.xlu0 %v876, 2
      %v909 = vpop.permute.xlu0 %908
      %v910 = vsel %vm564, %v907, %v909
      %v911 = vsel %vm564, %v909, %v907
      %v912 = vsel %vm592, %v911, 0.0
      %v913 = vsel %vm593, %v910, 0.0
      %914 = vrot.lane.b32.xlu0 %v875, 126
      %v915 = vpop.permute.xlu0 %914
      %916 = vrot.lane.b32.xlu0 %v876, 126
      %v917 = vpop.permute.xlu0 %916
      %v918 = vsel %vm585, %v915, %v917
      %v919 = vsel %vm585, %v917, %v915
      %v920 = vsel %vm632, %v918, 0.0
      %v921 = vsel %vm633, %v919, 0.0
      %922 = vrot.lane.b32.xlu0 %v875, 98
      %v923 = vpop.permute.xlu0 %922
      %924 = vrot.lane.b32.xlu0 %v876, 98
      %v925 = vpop.permute.xlu0 %924
      %v926 = vsel %vm774, %v923, %v925
      %v927 = vsel %vm774, %v925, %v923
      %v928 = vsel %vm781, %v926, 0.0
      %v929 = vsel %vm782, %v927, 0.0
      %v930 = vsel %vm592, %v928, 0.0
      %v931 = vsel %vm593, %v929, 0.0
      %932 = vrot.lane.b32.xlu0 %v875, 96
      %v933 = vpop.permute.xlu0 %932
      %934 = vrot.lane.b32.xlu0 %v876, 96
      %v935 = vpop.permute.xlu0 %934
      %v936 = vsel %vm791, %v933, %v935
      %v937 = vsel %vm791, %v935, %v933
      %v938 = vsel %vm781, %v936, 0.0
      %v939 = vsel %vm782, %v937, 0.0
      %940 = vrot.lane.b32.xlu0 %v875, 94
      %v941 = vpop.permute.xlu0 %940
      %942 = vrot.lane.b32.xlu0 %v876, 94
      %v943 = vpop.permute.xlu0 %942
      %v944 = vsel %vm800, %v941, %v943
      %v945 = vsel %vm800, %v943, %v941
      %v946 = vsel %vm781, %v944, 0.0
      %v947 = vsel %vm782, %v945, 0.0
      %v948 = vsel %vm632, %v946, 0.0
      %v949 = vsel %vm633, %v947, 0.0
      %v950 = vpack.c.bf16 %v894, %v886
      %v951 = vpack.c.bf16 %v895, %v887
      %v952 = vpack.c.bf16 %v912, %v904
      %v953 = vpack.c.bf16 %v913, %v905
      %v954 = vpack.c.bf16 %v920, %v875
      %v955 = vpack.c.bf16 %v921, %v876
      %v956 = vpack.c.bf16 %v938, %v930
      %v957 = vpack.c.bf16 %v939, %v931
      %v958 = vpack.c.bf16 %v948, %v948
      %v959 = vpack.c.bf16 %v949, %v949
      %v960 = vld [vmem:[%s5] sm:$0xff]
      %962 = vset.pattern.permute.xlu0 0
      %963 = vperm.xlu0 %962, %v960
      %v964 = vpop.permute.xlu0 %963
      %v967 = vsel %vm823, %v877, 0
      %v970 = vsel %vm827, %v958, 0
      %v973 = vsel %vm827, %v959, 0
      %975 = vmatprep.subr.bf16.mxu0 %v951
      %976 = vmatpush1.bf16.msra.mxu0 %v950
      %977 = vmatprep.subr.bf16.mxu0 %v953
      %978 = vmatpush1.bf16.msra.mxu0 %v952
      %979 = vmatprep.subr.bf16.mxu0 %v955
      %980 = vmatpush1.bf16.msra.mxu0 %v954
      %981 = vmatprep.subr.bf16.mxu0 %v957
      %982 = vmatpush1.bf16.msra.mxu0 %v956
      %983 = vmatprep.subr.bf16.mxu0 %v973
      %984 = vmatpush1.bf16.msra.mxu0 %v970
      %985 = vmatprep.subr.bf16.mxu0 0
      %986 = vmatpush1.bf16.msra.mxu0 0
      %987 = vmatprep.subr.bf16.mxu0 0
      %988 = vmatpush1.bf16.msra.mxu0 0
      %989 = vmatprep.subr.bf16.mxu0 0
      %990 = vmatpush1.bf16.msra.mxu0 0
      %991 = vmatprep.subr.bf16.mxu0 0
      %992 = vmatpush1.bf16.msra.mxu0 0
      %993 = vmatprep.subr.bf16.mxu0 0
      %994 = vmatpush1.bf16.msra.mxu0 0
      %995 = vmatprep.subr.bf16.mxu0 0
      %996 = vmatpush1.bf16.msra.mxu0 0
      %997 = vmatprep.subr.bf16.mxu0 0
      %998 = vmatpush1.bf16.msra.mxu0 0
      %999 = vmatprep.subr.bf16.mxu0 0
      %1000 = vmatpush1.bf16.msra.mxu0 0
      %1001 = vmatprep.subr.bf16.mxu0 0
      %1002 = vmatpush1.bf16.msra.mxu0 0
      %1003 = vmatprep.subr.bf16.mxu0 0
      %1004 = vmatpush1.bf16.msra.mxu0 0
      %1005 = vmatprep.subr.bf16.mxu0 0
      %1006 = vmatpush1.bf16.msra.mxu0 0
      %1007 = vmatprep.mubr.bf16.mxu0 0
      %1008 = vmatmul.mubr.bf16.gmra.mrb[0].mxu0 %v967
      %v1009 = vpop.f32.mrb[0].mxu0
      %v1010 = vadd.f32 %v964, %v1009
      %v1011 = vpop.f32.mrb[0].mxu0
      %v1012 = vadd.f32 %v964, %v1011
      %v1013 = vpop.f32.mrb[0].mxu0
      %v1014 = vpop.f32.mrb[0].mxu0
      %1015 = vdwg.mxu0
      %v1016 = vmax.f32 %v1010, 0.0
      %v1017 = vmax.f32 %v1012, 0.0
      %v1018 = vadd.f32 %v1016, %v712
      %v1019 = vadd.f32 %v1017, %v713
      %v1020 = vld [vmem:[%s6] sm:$0xf]
      %v1021 = vpack.c.bf16 %v703, %v703
      %v1022 = vpack.c.bf16 %v705, %v705
      %v1023 = vld [vmem:[%s7] sm:$0xff]
      %1025 = vset.pattern.permute.xlu0 0
      %1026 = vperm.xlu0 %1025, %v1023
      %v1027 = vpop.permute.xlu0 %1026
      %vm1029 = vcmask 64512
      %v1031 = vsel %vm1029, %v1020, 0
      %v1034 = vsel %vm827, %v1021, 0
      %v1037 = vsel %vm827, %v1022, 0
      %1039 = vmatprep.subr.bf16.mxu0 %v1037
      %1040 = vmatpush1.bf16.msra.mxu0 %v1034
      %1041 = vmatprep.subr.bf16.mxu0 0
      %1042 = vmatpush1.bf16.msra.mxu0 0
      %1043 = vmatprep.subr.bf16.mxu0 0
      %1044 = vmatpush1.bf16.msra.mxu0 0
      %1045 = vmatprep.subr.bf16.mxu0 0
      %1046 = vmatpush1.bf16.msra.mxu0 0
      %1047 = vmatprep.subr.bf16.mxu0 0
      %1048 = vmatpush1.bf16.msra.mxu0 0
      %1049 = vmatprep.subr.bf16.mxu0 0
      %1050 = vmatpush1.bf16.msra.mxu0 0
      %1051 = vmatprep.subr.bf16.mxu0 0
      %1052 = vmatpush1.bf16.msra.mxu0 0
      %1053 = vmatprep.subr.bf16.mxu0 0
      %1054 = vmatpush1.bf16.msra.mxu0 0
      %1055 = vmatprep.subr.bf16.mxu0 0
      %1056 = vmatpush1.bf16.msra.mxu0 0
      %1057 = vmatprep.subr.bf16.mxu0 0
      %1058 = vmatpush1.bf16.msra.mxu0 0
      %1059 = vmatprep.subr.bf16.mxu0 0
      %1060 = vmatpush1.bf16.msra.mxu0 0
      %1061 = vmatprep.subr.bf16.mxu0 0
      %1062 = vmatpush1.bf16.msra.mxu0 0
      %1063 = vmatprep.subr.bf16.mxu0 0
      %1064 = vmatpush1.bf16.msra.mxu0 0
      %1065 = vmatprep.subr.bf16.mxu0 0
      %1066 = vmatpush1.bf16.msra.mxu0 0
      %1067 = vmatprep.subr.bf16.mxu0 0
      %1068 = vmatpush1.bf16.msra.mxu0 0
      %1069 = vmatprep.subr.bf16.mxu0 0
      %1070 = vmatpush1.bf16.msra.mxu0 0
      %1071 = vmatprep.mubr.bf16.mxu0 0
      %1072 = vmatmul.mubr.bf16.gmra.mrb[0].mxu0 %v1031
      %v1073 = vpop.f32.mrb[0].mxu0
      %v1074 = vadd.f32 %v1027, %v1073
      %v1075 = vpop.f32.mrb[0].mxu0
      %v1076 = vadd.f32 %v1027, %v1075
      %v1077 = vpop.f32.mrb[0].mxu0
      %v1078 = vpop.f32.mrb[0].mxu0
      %1079 = vdwg.mxu0
      %v1080 = vmax.f32 %v1074, 0.0
      %v1081 = vmax.f32 %v1076, 0.0
      %v1082 = vpack.c.bf16 %v1080, %v1018
      %v1083 = vpack.c.bf16 %v1081, %v1019
      %v1084 = vld [vmem:[%s8] sm:$0xf]
      %v1085 = vld [vmem:[%s9] sm:$0xff]
      %1087 = vset.pattern.permute.xlu0 0
      %1088 = vperm.xlu0 %1087, %v1085
      %v1089 = vpop.permute.xlu0 %1088
      %v1092 = vsel %vm453, %v1084, 0
      %1094 = vmatprep.subr.bf16.mxu0 %v1083
      %1095 = vmatpush1.bf16.msra.mxu0 %v1082
      %1096 = vmatprep.subr.bf16.mxu0 0
      %1097 = vmatpush1.bf16.msra.mxu0 0
      %1098 = vmatprep.subr.bf16.mxu0 0
      %1099 = vmatpush1.bf16.msra.mxu0 0
      %1100 = vmatprep.subr.bf16.mxu0 0
      %1101 = vmatpush1.bf16.msra.mxu0 0
      %1102 = vmatprep.subr.bf16.mxu0 0
      %1103 = vmatpush1.bf16.msra.mxu0 0
      %1104 = vmatprep.subr.bf16.mxu0 0
      %1105 = vmatpush1.bf16.msra.mxu0 0
      %1106 = vmatprep.subr.bf16.mxu0 0
      %1107 = vmatpush1.bf16.msra.mxu0 0
      %1108 = vmatprep.subr.bf16.mxu0 0
      %1109 = vmatpush1.bf16.msra.mxu0 0
      %1110 = vmatprep.subr.bf16.mxu0 0
      %1111 = vmatpush1.bf16.msra.mxu0 0
      %1112 = vmatprep.subr.bf16.mxu0 0
      %1113 = vmatpush1.bf16.msra.mxu0 0
      %1114 = vmatprep.subr.bf16.mxu0 0
      %1115 = vmatpush1.bf16.msra.mxu0 0
      %1116 = vmatprep.subr.bf16.mxu0 0
      %1117 = vmatpush1.bf16.msra.mxu0 0
      %1118 = vmatprep.subr.bf16.mxu0 0
      %1119 = vmatpush1.bf16.msra.mxu0 0
      %1120 = vmatprep.subr.bf16.mxu0 0
      %1121 = vmatpush1.bf16.msra.mxu0 0
      %1122 = vmatprep.subr.bf16.mxu0 0
      %1123 = vmatpush1.bf16.msra.mxu0 0
      %1124 = vmatprep.subr.bf16.mxu0 0
      %1125 = vmatpush1.bf16.msra.mxu0 0
      %1126 = vmatprep.mubr.bf16.mxu0 0
      %1127 = vmatmul.mubr.bf16.gmra.mrb[0].mxu0 %v1092
      %v1128 = vpop.f32.mrb[0].mxu0
      %v1129 = vadd.f32 %v1089, %v1128
      %v1130 = vpop.f32.mrb[0].mxu0
      %v1131 = vadd.f32 %v1089, %v1130
      %v1132 = vpop.f32.mrb[0].mxu0
      %v1133 = vpop.f32.mrb[0].mxu0
      %1134 = vdwg.mxu0
      %v1135 = vmax.f32 %v1129, 0.0
      %v1136 = vmax.f32 %v1131, 0.0
      %1137 = vst [vmem:[%s394] sm:$0xff] %v1135
      %1138 = vst [vmem:[%s394 + $0x8] sm:$0xff] %v1136
      %p1139 = scmp.lt.s32.totalorder %s23, 1
      %s1140 = scalar_select %p1139, %s23, 1
      %s1141 = smul.addr %s1140, 2
      %s1142 = smul.addr %s1141, 8
      %s1143 = scalar_lea.vmem %s10, %s1142
      %p1144 = scmp.lt.s32.totalorder %s23, 1
      %s1145 = scalar_select %p1144, %s23, 1
      %s1146 = smul.addr %s1145, 2
      %s1147 = smul.addr %s1146, 8
      %s1148 = scalar_lea.vmem %s11, %s1147
      // Predicated region
      $region61: #{arblock_forward.1} parent=59 // pred_check
        %p1149 = pneg %p256
      $region62: #{arblock_forward.1} parent=59 // pred_check_branch
        %1151 = sbr.rel (%p1149) target = $region64
      $region63: #{arblock_forward.1} parent=59 // pred_region
        _
      $region64: #{arblock_forward.1} parent=59 // pred_fallthru
        _
      // Predicated region
      $region65: #{arblock_forward.1} parent=59 // pred_check
        %p1152 = pneg %p282
      $region66: #{arblock_forward.1} parent=59 // pred_check_branch
        %1154 = sbr.rel (%p1152) target = $region68
      $region67: #{arblock_forward.1} parent=59 // pred_region
        _
      $region68: #{arblock_forward.1} parent=59 // pred_fallthru
        _
    $region60: #{arblock_forward.1} parent=5 // pred_fallthru
      _
    %p1155 = scmp.le.s32.totalorder 2, %s18
    // Predicated region
    $region69: #{arblock_forward.1} parent=5 // pred_check
      %p1156 = pneg %p1155
    $region70: #{arblock_forward.1} parent=5 // pred_check_branch
      %1158 = sbr.rel (%p1156) target = $region72
    $region71: #{arblock_forward.1} parent=5 // pred_region
      %s1159 = ssub.s32 %s18, 2
      // Predicated region
      $region73: #{arblock_forward.1} parent=71 // pred_check
        %p1160 = pneg %p262
      $region74: #{arblock_forward.1} parent=71 // pred_check_branch
        %1162 = sbr.rel (%p1160) target = $region76
      $region75: #{arblock_forward.1} parent=71 // pred_region
        %p1163 = scmp.lt.s32.totalorder %s24, 1
        %s1164 = scalar_select %p1163, %s24, 1
        %s1165 = smul.addr %s1164, 2
        %s1166 = smul.addr %s1165, 8
        %s1167 = scalar_lea.vmem %s10, %s1166
      $region76: #{arblock_forward.1} parent=71 // pred_fallthru
        _
      // Predicated region
      $region77: #{arblock_forward.1} parent=71 // pred_check
        %p1168 = pneg %p288
      $region78: #{arblock_forward.1} parent=71 // pred_check_branch
        %1170 = sbr.rel (%p1168) target = $region80
      $region79: #{arblock_forward.1} parent=71 // pred_region
        %p1171 = scmp.lt.s32.totalorder %s24, 1
        %s1172 = scalar_select %p1171, %s24, 1
        %s1173 = smul.addr %s1172, 2
        %s1174 = smul.addr %s1173, 8
        %s1175 = scalar_lea.vmem %s11, %s1174
      $region80: #{arblock_forward.1} parent=71 // pred_fallthru
        _
    $region72: #{arblock_forward.1} parent=5 // pred_fallthru
      _
  $region6: #{arblock_forward.1} parent=0 // loop_footer
    %s22 = sadd.s32 1, %s18
  $region7: #{arblock_forward.1} parent=0 // loop_footer_branch
    %17 = sbr.rel target = $region3
  $region8: #{arblock_forward.1} parent=0 // loop_exit
    _

</llo_original>
